<compile_context>
chip_gen: v7x
topology: tpu7x:2x2x1
jax: 0.10.0
libtpu: 0.0.40
codegen_flags: <defaults>
</compile_context>

<pallas_src>
import jax
import jax.numpy as jnp
from jax import lax
from jax.experimental import pallas as pl
from jax.experimental.pallas import tpu as pltpu

F32 = jnp.float32
BF16 = jnp.bfloat16

# ---- small shapes consistent with the module (inp: (bs, in_ch, seq_len)) ----
BATCH = 2
IN_CH = 32           # in_ch
SEQ = 128            # seq_len (lane-dense: multiple of 128)
DK = 8               # dk
DV = 8               # dv
H = 2                # hv = hk = h
OUT_DIM = IN_CH      # out_dim=None -> in_ch, so shortcut == Identity

HDK = H * DK         # rows per Wl-folded Q block / rows of the stacked K slab
HDV = H * DV         # rows per Ww-folded V block (= rows of the per-batch od operand)
NQ = H * HDK         # Wl-folded Q rows   (g-major, then h, then dk)
NK = HDK             # K rows             (h-major, then dk)
NV = H * HDV         # Ww-folded V rows   (g-major, then d, then v)


def _full_spec(shape):
    return pl.BlockSpec(shape, lambda i: (0,) * len(shape))


# ---------------- fused talking-heads attention kernel ----------------
def talking_heads_kernel(x_ref, mask_ref, w_all_ref, wo_ref, o_ref):
    # x_ref:(E, B*S) f32   mask_ref:(1, B*S) f32   w_all_ref:(NQ+NK+NV, E) bf16
    # wo_ref:(E, H*DV) bf16   o_ref:(B, E, S) f32

    # Single stacked projection matmul for Q (Wl folded), K and V (Ww folded),
    # all heads and batch elements at once.
    x_bf = x_ref[...].astype(BF16)                                        # (E, B*S)
    proj = jnp.dot(w_all_ref[...], x_bf,
                   preferred_element_type=jnp.float32).astype(BF16)       # (NQ+NK+NV, B*S)
    wo = wo_ref[...]                                                      # (E, H*DV) bf16
    ones_row = jnp.ones((8, SEQ), BF16)   # lane-layout softmax denominators via the MXU

    for b in range(BATCH):                                                # unrolled (B=2)
        c0, c1 = b * SEQ, (b + 1) * SEQ
        k_b = proj[NQ:NQ + NK, c0:c1]                                     # (H*DK, S)
        mask_b = mask_ref[:, c0:c1]                                       # (1, S) key mask

        od = jnp.zeros((HDV, SEQ), jnp.float32)                           # rows = (d, v)
        for g in range(H):                                                # softmax heads
            q_g = proj[g * HDK:(g + 1) * HDK, c0:c1]                      # (H*DK, S)
            v_g = proj[NQ + NK + g * HDV:NQ + NK + (g + 1) * HDV, c0:c1]  # (H*DV, S)

            # Mixed logits EL_g = sum_h Wl[h,g] * Q_h^T K_h in ONE dot (Wl folded in q_g).
            el = lax.dot_general(q_g, k_b, (((0,), (0,)), ((), ())),
                                 preferred_element_type=jnp.float32)      # (Sq, Sk) f32
            el = el - mask_b                                              # mask over keys
            el = el - jnp.max(el, axis=-1, keepdims=True)
            p = jnp.exp(el).astype(BF16)                                  # unnormalized probs

            # Deferred-normalization value contraction; Ww is already folded into v_g.
            t = lax.dot_general(v_g, p, (((1,), (1,)), ((), ())),
                                preferred_element_type=jnp.float32)       # (H*DV, Sq)
            den = lax.dot_general(ones_row, p, (((1,), (1,)), ((), ())),
                                  preferred_element_type=jnp.float32)     # (8, Sq), rows equal
            od = od + t * pl.reciprocal(den[0:1, :], approx=True)         # EUP recip, 2-vreg scale

        # Output projection (also sums over heads on the MXU) + identity shortcut in f32.
        resid = jnp.dot(wo, od.astype(BF16),
                        preferred_element_type=jnp.float32)               # (E, Sq)
        o_ref[b] = x_ref[:, c0:c1] + resid


def talking_heads_forward(params, inp, mask):
    """TalkingHeads.forward: inp (bs, in_ch, seq_len), mask (bs, seq_len) -> inp + resid."""
    bsz, e, s = inp.shape

    # --- trace-time parameter prep: fold sigmoid(alpha*) and the head-mixing matrices ---
    aq = jax.nn.sigmoid(params['alphaq'])
    ak = jax.nn.sigmoid(params['alphak'])
    av = jax.nn.sigmoid(params['alphav'])

    wq_h = jnp.transpose(params['Wq'], (2, 1, 0))          # (H, DK, E): [h, dk, e]
    wk_h = jnp.transpose(params['Wk'], (2, 1, 0))          # (H, DK, E)
    wv_h = jnp.transpose(params['Wv'], (2, 1, 0))          # (H, DV, E): [d, v, e]

    # Pre-softmax mixing Wl folded into Q:  row (g,h,dk) = Wl[h,g]*sig(aq)*Wq[:,dk,h]
    wq_mix = (aq * params['Wl'].T[:, :, None, None] * wq_h[None]).reshape(NQ, e)
    # Stacked K:                            row (h,dk)   = sig(ak)*Wk[:,dk,h]
    wk_s = (ak * wk_h).reshape(NK, e)
    # Post-softmax mixing Ww folded into V: row (g,d,v)  = Ww[g,d]*sig(av)*Wv[:,v,d]
    wv_mix = (av * params['Ww'][:, :, None, None] * wv_h[None]).reshape(NV, e)
    w_all = jnp.concatenate([wq_mix, wk_s, wv_mix], axis=0).astype(BF16)   # (80, E)

    # Wo rows are (dv-major, head-minor); permute to head-major and pre-transpose.
    wo_t = jnp.transpose(params['Wo'].reshape(DV, H, OUT_DIM),
                         (2, 1, 0)).reshape(OUT_DIM, HDV).astype(BF16)      # (E, H*DV)

    # Activation as a lane-concatenated (E, B*S) slab; mask flattened to (1, B*S).
    x2d = jnp.transpose(inp.astype(F32), (1, 0, 2)).reshape(e, bsz * s)
    mask2d = mask.astype(F32).reshape(1, bsz * s)

    return pl.pallas_call(
        talking_heads_kernel,
        grid=(1,),
        in_specs=[_full_spec((e, bsz * s)), _full_spec((1, bsz * s)),
                  _full_spec(w_all.shape), _full_spec(wo_t.shape)],
        out_specs=_full_spec((bsz, OUT_DIM, s)),
        out_shape=jax.ShapeDtypeStruct((bsz, OUT_DIM, s), F32),
        compiler_params=pltpu.CompilerParams(dimension_semantics=("arbitrary",)),
    )(x2d, mask2d, w_all, wo_t)


# ---------------- pure-JAX reference (line-by-line port of the PyTorch forward) ----------------
def talking_heads_reference(params, inp, mask):
    Q = jax.nn.sigmoid(params['alphaq']) * jnp.einsum('abc,bde->adce', inp, params['Wq'])
    K = jax.nn.sigmoid(params['alphak']) * jnp.einsum('abc,bde->adce', inp, params['Wk'])
    V = jax.nn.sigmoid(params['alphav']) * jnp.einsum('abc,bde->adce', inp, params['Wv'])
    J = jnp.einsum('abcd,abed->aced', Q, K)
    EL = jnp.einsum('abcd,de->abce', J, params['Wl']) - mask[:, None, :, None]
    W = jax.nn.softmax(EL, axis=2)
    U = jnp.einsum('abcd,de->abce', W, params['Ww'])
    O = jnp.einsum('abcd,aecd->abed', U, V)
    O = O.reshape(O.shape[0], -1, DV * H)
    resid = jnp.einsum('abc,cd->adb', O, params['Wo'])
    return inp + resid


# ---------------- parameters (deterministic init, PyTorch __init__ statistics) ----------------
def init_params(key):
    ks = jax.random.split(key, 6)
    nrm = lambda k, shape, std: (std * jax.random.normal(k, shape)).astype(F32)
    return {
        # initQ / initK: std = in_ch**-0.5 * dk**-0.25
        'Wq': nrm(ks[0], (IN_CH, DK, H), IN_CH ** -0.5 * DK ** -0.25),
        'Wk': nrm(ks[1], (IN_CH, DK, H), IN_CH ** -0.5 * DK ** -0.25),
        # initV defaults: (1/0.012) * h**-0.5 * in_ch**-0.5 * 40**-0.5
        'Wv': nrm(ks[2], (IN_CH, DV, H),
                  (1.0 / 0.012) * H ** -0.5 * IN_CH ** -0.5 * 40.0 ** -0.5),
        'Wl': nrm(ks[3], (H, H), 0.5 * H ** -0.5),     # initL
        'Ww': nrm(ks[4], (H, H), 0.01),                # initW
        'Wo': nrm(ks[5], (DV * H, OUT_DIM), 0.03),     # initO
        'alphaq': jnp.array(2.0, F32),
        'alphak': jnp.array(2.0, F32),
        'alphav': jnp.array(2.0, F32),
    }


if __name__ == "__main__":
    key = jax.random.PRNGKey(0)
    kp, kx = jax.random.split(key)
    params = init_params(kp)

    inp = jax.random.normal(kx, (BATCH, IN_CH, SEQ), F32)   # (bs, in_ch, seq_len)
    mask = jnp.zeros((BATCH, SEQ), F32)                     # zeros tensor => no masking

    out = jax.jit(talking_heads_forward)(params, inp, mask)
    out = jax.block_until_ready(out)

    assert out.shape == (BATCH, OUT_DIM, SEQ)
    assert bool(jnp.all(jnp.isfinite(out)))

    # Validate against the pure-JAX f32 reference (kernel uses bf16 MXU operands + approx recip).
    ref = talking_heads_reference(params, inp, mask)
    assert bool(jnp.allclose(out, ref, atol=3e-2, rtol=3e-2)), \
        float(jnp.max(jnp.abs(out - ref)))
    print("KERNEL_OK")
</pallas_src>

<mosaic_0001>
module attributes {stable_mosaic.version = 11 : i64} {
  func.func @talking_heads_kernel(%arg0: i32, %arg1: memref<32x256xf32, #tpu.memory_space<vmem>>, %arg2: memref<1x256xf32, #tpu.memory_space<vmem>>, %arg3: memref<80x32xbf16, #tpu.memory_space<vmem>>, %arg4: memref<32x16xbf16, #tpu.memory_space<vmem>>, %arg5: memref<2x32x128xf32, #tpu.memory_space<vmem>>) attributes {dimension_semantics = [#tpu.dimension_semantics<arbitrary>], iteration_bounds = array<i64: 1>, scalar_prefetch = 0 : i64, scratch_operands = 0 : i64, tpu.core_type = #tpu.core_type<tc>, window_params = [{pipeline_mode = #tpu.pipeline_mode<synchronous>, transform_indices = @transform_0, window_bounds = array<i64: 32, 256>}, {pipeline_mode = #tpu.pipeline_mode<synchronous>, transform_indices = @transform_1, window_bounds = array<i64: 1, 256>}, {pipeline_mode = #tpu.pipeline_mode<synchronous>, transform_indices = @transform_2, window_bounds = array<i64: 80, 32>}, {pipeline_mode = #tpu.pipeline_mode<synchronous>, transform_indices = @transform_3, window_bounds = array<i64: 32, 16>}, {pipeline_mode = #tpu.pipeline_mode<synchronous>, transform_indices = @transform_4, window_bounds = array<i64: 2, 32, 128>}]} {
    %c0 = arith.constant 0 : index
    %c0_0 = arith.constant 0 : index
    %0 = vector.load %arg1[%c0, %c0_0] : memref<32x256xf32, #tpu.memory_space<vmem>>, vector<32x256xf32>
    %1 = arith.truncf %0 : vector<32x256xf32> to vector<32x256xbf16>
    %c0_1 = arith.constant 0 : index
    %c0_2 = arith.constant 0 : index
    %2 = vector.load %arg3[%c0_1, %c0_2] : memref<80x32xbf16, #tpu.memory_space<vmem>>, vector<80x32xbf16>
    %cst = arith.constant dense<0.000000e+00> : vector<80x256xf32>
    %3 = tpu.matmul %2, %1, %cst {dimension_numbers = #tpu.dot_dimension_numbers<[1], [0], [0], [1], [0, 0, 1, 1], [], []>} : vector<80x32xbf16>, vector<32x256xbf16>, vector<80x256xf32> -> vector<80x256xf32>
    %4 = arith.truncf %3 : vector<80x256xf32> to vector<80x256xbf16>
    %c0_3 = arith.constant 0 : index
    %c0_4 = arith.constant 0 : index
    %5 = vector.load %arg4[%c0_3, %c0_4] : memref<32x16xbf16, #tpu.memory_space<vmem>>, vector<32x16xbf16>
    %cst_5 = arith.constant 1.000000e+00 : bf16
    %6 = vector.broadcast %cst_5 : bf16 to vector<8x128xbf16>
    %7 = vector.extract_strided_slice %4 {offsets = [32, 0], sizes = [16, 128], strides = [1, 1]} : vector<80x256xbf16> to vector<16x128xbf16>
    %c0_6 = arith.constant 0 : index
    %c0_7 = arith.constant 0 : index
    %8 = vector.load %arg2[%c0_6, %c0_7] : memref<1x256xf32, #tpu.memory_space<vmem>>, vector<1x128xf32>
    %cst_8 = arith.constant 0.000000e+00 : f32
    %9 = vector.broadcast %cst_8 : f32 to vector<16x128xf32>
    %10 = vector.extract_strided_slice %4 {offsets = [0, 0], sizes = [16, 128], strides = [1, 1]} : vector<80x256xbf16> to vector<16x128xbf16>
    %11 = vector.extract_strided_slice %4 {offsets = [48, 0], sizes = [16, 128], strides = [1, 1]} : vector<80x256xbf16> to vector<16x128xbf16>
    %cst_9 = arith.constant dense<0.000000e+00> : vector<128x128xf32>
    %12 = tpu.matmul %10, %7, %cst_9 {dimension_numbers = #tpu.dot_dimension_numbers<[0], [0], [1], [1], [0, 1, 1, 1], [], []>} : vector<16x128xbf16>, vector<16x128xbf16>, vector<128x128xf32> -> vector<128x128xf32>
    %13 = vector.broadcast %8 : vector<1x128xf32> to vector<128x128xf32>
    %14 = arith.subf %12, %13 : vector<128x128xf32>
    %cst_10 = arith.constant dense<0xFF800000> : vector<128xf32>
    %15 = vector.multi_reduction <maximumf>, %14, %cst_10 [1] : vector<128x128xf32> to vector<128xf32>
    %16 = vector.shape_cast %15 : vector<128xf32> to vector<128x1xf32>
    %17 = vector.broadcast %16 : vector<128x1xf32> to vector<128x128xf32>
    %18 = arith.subf %14, %17 : vector<128x128xf32>
    %19 = math.exp %18 : vector<128x128xf32>
    %20 = arith.truncf %19 : vector<128x128xf32> to vector<128x128xbf16>
    %cst_11 = arith.constant dense<0.000000e+00> : vector<16x128xf32>
    %21 = tpu.matmul %11, %20, %cst_11 {dimension_numbers = #tpu.dot_dimension_numbers<[1], [1], [0], [0], [0, 0, 1, 0], [], []>} : vector<16x128xbf16>, vector<128x128xbf16>, vector<16x128xf32> -> vector<16x128xf32>
    %cst_12 = arith.constant dense<0.000000e+00> : vector<8x128xf32>
    %22 = tpu.matmul %6, %20, %cst_12 {dimension_numbers = #tpu.dot_dimension_numbers<[1], [1], [0], [0], [0, 0, 1, 0], [], []>} : vector<8x128xbf16>, vector<128x128xbf16>, vector<8x128xf32> -> vector<8x128xf32>
    %23 = vector.extract_strided_slice %22 {offsets = [0, 0], sizes = [1, 128], strides = [1, 1]} : vector<8x128xf32> to vector<1x128xf32>
    %24 = tpu.reciprocal %23 {approx = true} : vector<1x128xf32> -> vector<1x128xf32>
    %25 = vector.broadcast %24 : vector<1x128xf32> to vector<16x128xf32>
    %26 = arith.mulf %21, %25 : vector<16x128xf32>
    %27 = arith.addf %9, %26 : vector<16x128xf32>
    %28 = vector.extract_strided_slice %4 {offsets = [16, 0], sizes = [16, 128], strides = [1, 1]} : vector<80x256xbf16> to vector<16x128xbf16>
    %29 = vector.extract_strided_slice %4 {offsets = [64, 0], sizes = [16, 128], strides = [1, 1]} : vector<80x256xbf16> to vector<16x128xbf16>
    %cst_13 = arith.constant dense<0.000000e+00> : vector<128x128xf32>
    %30 = tpu.matmul %28, %7, %cst_13 {dimension_numbers = #tpu.dot_dimension_numbers<[0], [0], [1], [1], [0, 1, 1, 1], [], []>} : vector<16x128xbf16>, vector<16x128xbf16>, vector<128x128xf32> -> vector<128x128xf32>
    %31 = vector.broadcast %8 : vector<1x128xf32> to vector<128x128xf32>
    %32 = arith.subf %30, %31 : vector<128x128xf32>
    %cst_14 = arith.constant dense<0xFF800000> : vector<128xf32>
    %33 = vector.multi_reduction <maximumf>, %32, %cst_14 [1] : vector<128x128xf32> to vector<128xf32>
    %34 = vector.shape_cast %33 : vector<128xf32> to vector<128x1xf32>
    %35 = vector.broadcast %34 : vector<128x1xf32> to vector<128x128xf32>
    %36 = arith.subf %32, %35 : vector<128x128xf32>
    %37 = math.exp %36 : vector<128x128xf32>
    %38 = arith.truncf %37 : vector<128x128xf32> to vector<128x128xbf16>
    %cst_15 = arith.constant dense<0.000000e+00> : vector<16x128xf32>
    %39 = tpu.matmul %29, %38, %cst_15 {dimension_numbers = #tpu.dot_dimension_numbers<[1], [1], [0], [0], [0, 0, 1, 0], [], []>} : vector<16x128xbf16>, vector<128x128xbf16>, vector<16x128xf32> -> vector<16x128xf32>
    %cst_16 = arith.constant dense<0.000000e+00> : vector<8x128xf32>
    %40 = tpu.matmul %6, %38, %cst_16 {dimension_numbers = #tpu.dot_dimension_numbers<[1], [1], [0], [0], [0, 0, 1, 0], [], []>} : vector<8x128xbf16>, vector<128x128xbf16>, vector<8x128xf32> -> vector<8x128xf32>
    %41 = vector.extract_strided_slice %40 {offsets = [0, 0], sizes = [1, 128], strides = [1, 1]} : vector<8x128xf32> to vector<1x128xf32>
    %42 = tpu.reciprocal %41 {approx = true} : vector<1x128xf32> -> vector<1x128xf32>
    %43 = vector.broadcast %42 : vector<1x128xf32> to vector<16x128xf32>
    %44 = arith.mulf %39, %43 : vector<16x128xf32>
    %45 = arith.addf %27, %44 : vector<16x128xf32>
    %46 = arith.truncf %45 : vector<16x128xf32> to vector<16x128xbf16>
    %cst_17 = arith.constant dense<0.000000e+00> : vector<32x128xf32>
    %47 = tpu.matmul %5, %46, %cst_17 {dimension_numbers = #tpu.dot_dimension_numbers<[1], [0], [0], [1], [0, 0, 1, 1], [], []>} : vector<32x16xbf16>, vector<16x128xbf16>, vector<32x128xf32> -> vector<32x128xf32>
    %c0_18 = arith.constant 0 : index
    %c0_19 = arith.constant 0 : index
    %48 = vector.load %arg1[%c0_18, %c0_19] : memref<32x256xf32, #tpu.memory_space<vmem>>, vector<32x128xf32>
    %49 = arith.addf %48, %47 : vector<32x128xf32>
    %c0_20 = arith.constant 0 : index
    %c0_21 = arith.constant 0 : index
    %c0_22 = arith.constant 0 : index
    %50 = vector.load %arg5[%c0_20, %c0_21, %c0_22] : memref<2x32x128xf32, #tpu.memory_space<vmem>>, vector<1x32x128xf32>
    %51 = vector.shape_cast %50 : vector<1x32x128xf32> to vector<32x128xf32>
    %52 = vector.shape_cast %49 : vector<32x128xf32> to vector<1x32x128xf32>
    tpu.vector_store %arg5[%c0_20, %c0_21, %c0_22], %52 {strides = array<i32>} : memref<2x32x128xf32, #tpu.memory_space<vmem>>, vector<1x32x128xf32>,
    %53 = vector.extract_strided_slice %4 {offsets = [32, 128], sizes = [16, 128], strides = [1, 1]} : vector<80x256xbf16> to vector<16x128xbf16>
    %c0_23 = arith.constant 0 : index
    %c128 = arith.constant 128 : index
    %54 = vector.load %arg2[%c0_23, %c128] : memref<1x256xf32, #tpu.memory_space<vmem>>, vector<1x128xf32>
    %cst_24 = arith.constant 0.000000e+00 : f32
    %55 = vector.broadcast %cst_24 : f32 to vector<16x128xf32>
    %56 = vector.extract_strided_slice %4 {offsets = [0, 128], sizes = [16, 128], strides = [1, 1]} : vector<80x256xbf16> to vector<16x128xbf16>
    %57 = vector.extract_strided_slice %4 {offsets = [48, 128], sizes = [16, 128], strides = [1, 1]} : vector<80x256xbf16> to vector<16x128xbf16>
    %cst_25 = arith.constant dense<0.000000e+00> : vector<128x128xf32>
    %58 = tpu.matmul %56, %53, %cst_25 {dimension_numbers = #tpu.dot_dimension_numbers<[0], [0], [1], [1], [0, 1, 1, 1], [], []>} : vector<16x128xbf16>, vector<16x128xbf16>, vector<128x128xf32> -> vector<128x128xf32>
    %59 = vector.broadcast %54 : vector<1x128xf32> to vector<128x128xf32>
    %60 = arith.subf %58, %59 : vector<128x128xf32>
    %cst_26 = arith.constant dense<0xFF800000> : vector<128xf32>
    %61 = vector.multi_reduction <maximumf>, %60, %cst_26 [1] : vector<128x128xf32> to vector<128xf32>
    %62 = vector.shape_cast %61 : vector<128xf32> to vector<128x1xf32>
    %63 = vector.broadcast %62 : vector<128x1xf32> to vector<128x128xf32>
    %64 = arith.subf %60, %63 : vector<128x128xf32>
    %65 = math.exp %64 : vector<128x128xf32>
    %66 = arith.truncf %65 : vector<128x128xf32> to vector<128x128xbf16>
    %cst_27 = arith.constant dense<0.000000e+00> : vector<16x128xf32>
    %67 = tpu.matmul %57, %66, %cst_27 {dimension_numbers = #tpu.dot_dimension_numbers<[1], [1], [0], [0], [0, 0, 1, 0], [], []>} : vector<16x128xbf16>, vector<128x128xbf16>, vector<16x128xf32> -> vector<16x128xf32>
    %cst_28 = arith.constant dense<0.000000e+00> : vector<8x128xf32>
    %68 = tpu.matmul %6, %66, %cst_28 {dimension_numbers = #tpu.dot_dimension_numbers<[1], [1], [0], [0], [0, 0, 1, 0], [], []>} : vector<8x128xbf16>, vector<128x128xbf16>, vector<8x128xf32> -> vector<8x128xf32>
    %69 = vector.extract_strided_slice %68 {offsets = [0, 0], sizes = [1, 128], strides = [1, 1]} : vector<8x128xf32> to vector<1x128xf32>
    %70 = tpu.reciprocal %69 {approx = true} : vector<1x128xf32> -> vector<1x128xf32>
    %71 = vector.broadcast %70 : vector<1x128xf32> to vector<16x128xf32>
    %72 = arith.mulf %67, %71 : vector<16x128xf32>
    %73 = arith.addf %55, %72 : vector<16x128xf32>
    %74 = vector.extract_strided_slice %4 {offsets = [16, 128], sizes = [16, 128], strides = [1, 1]} : vector<80x256xbf16> to vector<16x128xbf16>
    %75 = vector.extract_strided_slice %4 {offsets = [64, 128], sizes = [16, 128], strides = [1, 1]} : vector<80x256xbf16> to vector<16x128xbf16>
    %cst_29 = arith.constant dense<0.000000e+00> : vector<128x128xf32>
    %76 = tpu.matmul %74, %53, %cst_29 {dimension_numbers = #tpu.dot_dimension_numbers<[0], [0], [1], [1], [0, 1, 1, 1], [], []>} : vector<16x128xbf16>, vector<16x128xbf16>, vector<128x128xf32> -> vector<128x128xf32>
    %77 = vector.broadcast %54 : vector<1x128xf32> to vector<128x128xf32>
    %78 = arith.subf %76, %77 : vector<128x128xf32>
    %cst_30 = arith.constant dense<0xFF800000> : vector<128xf32>
    %79 = vector.multi_reduction <maximumf>, %78, %cst_30 [1] : vector<128x128xf32> to vector<128xf32>
    %80 = vector.shape_cast %79 : vector<128xf32> to vector<128x1xf32>
    %81 = vector.broadcast %80 : vector<128x1xf32> to vector<128x128xf32>
    %82 = arith.subf %78, %81 : vector<128x128xf32>
    %83 = math.exp %82 : vector<128x128xf32>
    %84 = arith.truncf %83 : vector<128x128xf32> to vector<128x128xbf16>
    %cst_31 = arith.constant dense<0.000000e+00> : vector<16x128xf32>
    %85 = tpu.matmul %75, %84, %cst_31 {dimension_numbers = #tpu.dot_dimension_numbers<[1], [1], [0], [0], [0, 0, 1, 0], [], []>} : vector<16x128xbf16>, vector<128x128xbf16>, vector<16x128xf32> -> vector<16x128xf32>
    %cst_32 = arith.constant dense<0.000000e+00> : vector<8x128xf32>
    %86 = tpu.matmul %6, %84, %cst_32 {dimension_numbers = #tpu.dot_dimension_numbers<[1], [1], [0], [0], [0, 0, 1, 0], [], []>} : vector<8x128xbf16>, vector<128x128xbf16>, vector<8x128xf32> -> vector<8x128xf32>
    %87 = vector.extract_strided_slice %86 {offsets = [0, 0], sizes = [1, 128], strides = [1, 1]} : vector<8x128xf32> to vector<1x128xf32>
    %88 = tpu.reciprocal %87 {approx = true} : vector<1x128xf32> -> vector<1x128xf32>
    %89 = vector.broadcast %88 : vector<1x128xf32> to vector<16x128xf32>
    %90 = arith.mulf %85, %89 : vector<16x128xf32>
    %91 = arith.addf %73, %90 : vector<16x128xf32>
    %92 = arith.truncf %91 : vector<16x128xf32> to vector<16x128xbf16>
    %cst_33 = arith.constant dense<0.000000e+00> : vector<32x128xf32>
    %93 = tpu.matmul %5, %92, %cst_33 {dimension_numbers = #tpu.dot_dimension_numbers<[1], [0], [0], [1], [0, 0, 1, 1], [], []>} : vector<32x16xbf16>, vector<16x128xbf16>, vector<32x128xf32> -> vector<32x128xf32>
    %c0_34 = arith.constant 0 : index
    %c128_35 = arith.constant 128 : index
    %94 = vector.load %arg1[%c0_34, %c128_35] : memref<32x256xf32, #tpu.memory_space<vmem>>, vector<32x128xf32>
    %95 = arith.addf %94, %93 : vector<32x128xf32>
    %c1 = arith.constant 1 : index
    %c0_36 = arith.constant 0 : index
    %c0_37 = arith.constant 0 : index
    %96 = vector.load %arg5[%c1, %c0_36, %c0_37] : memref<2x32x128xf32, #tpu.memory_space<vmem>>, vector<1x32x128xf32>
    %97 = vector.shape_cast %96 : vector<1x32x128xf32> to vector<32x128xf32>
    %98 = vector.shape_cast %95 : vector<32x128xf32> to vector<1x32x128xf32>
    tpu.vector_store %arg5[%c1, %c0_36, %c0_37], %98 {strides = array<i32>} : memref<2x32x128xf32, #tpu.memory_space<vmem>>, vector<1x32x128xf32>,
    return
  }
  func.func @transform_0(%arg0: i32) -> (i32, i32) {
    %c0_i32 = arith.constant 0 : i32
    %c0_i32_0 = arith.constant 0 : i32
    %c0_i32_1 = arith.constant 0 : i32
    return %c0_i32, %c0_i32_0 : i32, i32
  }
  func.func @transform_1(%arg0: i32) -> (i32, i32) {
    %c0_i32 = arith.constant 0 : i32
    %c0_i32_0 = arith.constant 0 : i32
    %c0_i32_1 = arith.constant 0 : i32
    return %c0_i32, %c0_i32_0 : i32, i32
  }
  func.func @transform_2(%arg0: i32) -> (i32, i32) {
    %c0_i32 = arith.constant 0 : i32
    %c0_i32_0 = arith.constant 0 : i32
    %c0_i32_1 = arith.constant 0 : i32
    return %c0_i32, %c0_i32_0 : i32, i32
  }
  func.func @transform_3(%arg0: i32) -> (i32, i32) {
    %c0_i32 = arith.constant 0 : i32
    %c0_i32_0 = arith.constant 0 : i32
    %c0_i32_1 = arith.constant 0 : i32
    return %c0_i32, %c0_i32_0 : i32, i32
  }
  func.func @transform_4(%arg0: i32) -> (i32, i32, i32) {
    %c0_i32 = arith.constant 0 : i32
    %c0_i32_0 = arith.constant 0 : i32
    %c0_i32_1 = arith.constant 0 : i32
    %c0_i32_2 = arith.constant 0 : i32
    return %c0_i32, %c0_i32_0, %c0_i32_1 : i32, i32, i32
  }
}

</mosaic_0001>

<llo_original>
// kernel: talking_heads_forward.1
$region0: #{talking_heads_forward.1}
  #allocation0 [shape = 'u32[]', space=smem, size = 0x4, offset = 0x4, fixed_abs, tag = 'smem constant byte address 0x4 - core index']
  #allocation1 [shape = 'u32[144,128]{1,0:T(1,128)}', space=vmem, size = 0x12000, scoped, tag = 'internal scratch']
  %s0 = inlined_call_operand.vmem [shape: f32[32,256], index: 0, kind: input, shape index: {}]
  %s1 = inlined_call_operand.vmem [shape: f32[1,256], index: 1, kind: input, shape index: {}]
  %s2 = inlined_call_operand.vmem [shape: bf16[80,32], index: 2, kind: input, shape index: {}]
  %s3 = inlined_call_operand.vmem [shape: bf16[32,16], index: 3, kind: input, shape index: {}]
  %s4 = inlined_call_operand.hbm [shape: f32[2,32,128], index: 4, kind: output, shape index: {}]
  %s5 = sld [smem:[#allocation0]]
  $region26: #{talking_heads_forward.1} parent=0
    _
  %s7 = ssub.s32 1, %s5
  %s8 = scalar_select 0, %s7, %s5
  $region1: #{talking_heads_forward.1} parent=0
    #allocation2 [shape = 'u8[32768]{0}', space=vmem, size = 0x8000, scoped, tag = 'output window, operand 0, single buffered']
    #allocation3 [shape = 's32[1]{0}', space=sflag, size = 0x4, scoped, tag = 'scoped memory for talking_heads_forward.1']
    %9 = vsyncpa [#allocation3], 0
    // Predicated region
    $region2: #{talking_heads_forward.1} parent=1 // pred_check
      _
    $region3: #{talking_heads_forward.1} parent=1 // pred_check_branch
      %11 = sbr.rel (0) target = $region5
    $region4: #{talking_heads_forward.1} parent=1 // pred_region
      _
    $region5: #{talking_heads_forward.1} parent=1 // pred_fallthru
      _
    // Predicated region
    $region6: #{talking_heads_forward.1} parent=1 // pred_check
      _
    $region7: #{talking_heads_forward.1} parent=1 // pred_check_branch
      %13 = sbr.rel (0) target = $region9
    $region8: #{talking_heads_forward.1} parent=1 // pred_region
      _
    $region9: #{talking_heads_forward.1} parent=1 // pred_fallthru
      _
    // Predicated region
    $region10: #{talking_heads_forward.1} parent=1 // pred_check
      _
    $region11: #{talking_heads_forward.1} parent=1 // pred_check_branch
      %15 = sbr.rel (0) target = $region13
    $region12: #{talking_heads_forward.1} parent=1 // pred_region
      _
    $region13: #{talking_heads_forward.1} parent=1 // pred_fallthru
      _
    // Predicated region
    $region14: #{talking_heads_forward.1} parent=1 // pred_check
      _
    $region15: #{talking_heads_forward.1} parent=1 // pred_check_branch
      %17 = sbr.rel (0) target = $region17
    $region16: #{talking_heads_forward.1} parent=1 // pred_region
      _
    $region17: #{talking_heads_forward.1} parent=1 // pred_fallthru
      _
    %v20 = vld [vmem:[%s0] sm:$0xff]
    %v21 = vld [vmem:[%s0 + $0x8] sm:$0xff]
    %v22 = vld [vmem:[%s0 + $0x10] sm:$0xff]
    %v23 = vld [vmem:[%s0 + $0x18] sm:$0xff]
    %v24 = vld [vmem:[%s0 + $0x20] sm:$0xff]
    %v25 = vld [vmem:[%s0 + $0x28] sm:$0xff]
    %v26 = vld [vmem:[%s0 + $0x30] sm:$0xff]
    %v27 = vld [vmem:[%s0 + $0x38] sm:$0xff]
    %v28 = vpack.c.bf16 %v22, %v20
    %v29 = vpack.c.bf16 %v23, %v21
    %v30 = vpack.c.bf16 %v26, %v24
    %v31 = vpack.c.bf16 %v27, %v25
    %v32 = vld [vmem:[%s2] sm:$0xf]
    %v33 = vld [vmem:[%s2 + $0x4] sm:$0xf]
    %v34 = vld [vmem:[%s2 + $0x8] sm:$0xf]
    %v35 = vld [vmem:[%s2 + $0xc] sm:$0xf]
    %v36 = vld [vmem:[%s2 + $0x10] sm:$0xf]
    %v37 = vld [vmem:[%s2 + $0x14] sm:$0xf]
    %v38 = vld [vmem:[%s2 + $0x18] sm:$0xf]
    %v39 = vld [vmem:[%s2 + $0x1c] sm:$0xf]
    %v40 = vld [vmem:[%s2 + $0x20] sm:$0xf]
    %v41 = vld [vmem:[%s2 + $0x24] sm:$0xf]
    %v52 = vunpack.c.l.b16 %v32
    %v53 = vunpack.c.l.b16 %v33
    %v54 = vunpack.c.l.b16 %v34
    %v55 = vunpack.c.l.b16 %v35
    %v56 = vunpack.c.l.b16 %v36
    %v57 = vunpack.c.l.b16 %v37
    %v58 = vunpack.c.l.b16 %v38
    %v59 = vunpack.c.l.b16 %v39
    %v60 = vunpack.c.l.b16 %v40
    %v61 = vunpack.c.l.b16 %v41
    %v62 = vpack.c.b16 %v53, %v52
    %v63 = vpack.c.b16 %v55, %v54
    %v64 = vpack.c.b16 %v57, %v56
    %v65 = vpack.c.b16 %v59, %v58
    %v66 = vpack.c.b16 %v61, %v60
    %vm67 = vcmask 261120
    %v69 = vsel %vm67, %v62, 0
    %v72 = vsel %vm67, %v63, 0
    %v75 = vsel %vm67, %v64, 0
    %v78 = vsel %vm67, %v65, 0
    %v81 = vsel %vm67, %v66, 0
    %83 = vmatprep.subr.bf16.mxu0 %v29
    %84 = vmatpush1.bf16.msra.mxu0 %v28
    %85 = vmatprep.subr.bf16.mxu0 %v31
    %86 = vmatpush1.bf16.msra.mxu0 %v30
    %87 = vmatprep.subr.bf16.mxu0 0
    %88 = vmatpush1.bf16.msra.mxu0 0
    %89 = vmatprep.subr.bf16.mxu0 0
    %90 = vmatpush1.bf16.msra.mxu0 0
    %91 = vmatprep.subr.bf16.mxu0 0
    %92 = vmatpush1.bf16.msra.mxu0 0
    %93 = vmatprep.subr.bf16.mxu0 0
    %94 = vmatpush1.bf16.msra.mxu0 0
    %95 = vmatprep.subr.bf16.mxu0 0
    %96 = vmatpush1.bf16.msra.mxu0 0
    %97 = vmatprep.subr.bf16.mxu0 0
    %98 = vmatpush1.bf16.msra.mxu0 0
    %99 = vmatprep.subr.bf16.mxu0 0
    %100 = vmatpush1.bf16.msra.mxu0 0
    %101 = vmatprep.subr.bf16.mxu0 0
    %102 = vmatpush1.bf16.msra.mxu0 0
    %103 = vmatprep.subr.bf16.mxu0 0
    %104 = vmatpush1.bf16.msra.mxu0 0
    %105 = vmatprep.subr.bf16.mxu0 0
    %106 = vmatpush1.bf16.msra.mxu0 0
    %107 = vmatprep.subr.bf16.mxu0 0
    %108 = vmatpush1.bf16.msra.mxu0 0
    %109 = vmatprep.subr.bf16.mxu0 0
    %110 = vmatpush1.bf16.msra.mxu0 0
    %111 = vmatprep.subr.bf16.mxu0 0
    %112 = vmatpush1.bf16.msra.mxu0 0
    %113 = vmatprep.subr.bf16.mxu0 0
    %114 = vmatpush1.bf16.msra.mxu0 0
    %115 = vmatprep.mubr.bf16.mxu0 0
    %116 = vmatmul.mubr.bf16.gmra.mrb[0].mxu0 %v69
    %v117 = vpop.f32.mrb[0].mxu0
    %v118 = vadd.f32 0.0, %v117
    %v119 = vpop.f32.mrb[0].mxu0
    %v120 = vadd.f32 0.0, %v119
    %v121 = vpop.f32.mrb[0].mxu0
    %v122 = vadd.f32 0.0, %v121
    %v123 = vpop.f32.mrb[0].mxu0
    %v124 = vadd.f32 0.0, %v123
    %125 = vmatprep.mubr.bf16.mxu0 0
    %126 = vmatmul.mubr.bf16.gmra.mrb[0].mxu0 %v72
    %v127 = vpop.f32.mrb[0].mxu0
    %v128 = vadd.f32 0.0, %v127
    %v129 = vpop.f32.mrb[0].mxu0
    %v130 = vadd.f32 0.0, %v129
    %v131 = vpop.f32.mrb[0].mxu0
    %v132 = vadd.f32 0.0, %v131
    %v133 = vpop.f32.mrb[0].mxu0
    %v134 = vadd.f32 0.0, %v133
    %135 = vmatprep.mubr.bf16.mxu0 0
    %136 = vmatmul.mubr.bf16.gmra.mrb[0].mxu0 %v75
    %v137 = vpop.f32.mrb[0].mxu0
    %v138 = vadd.f32 0.0, %v137
    %v139 = vpop.f32.mrb[0].mxu0
    %v140 = vadd.f32 0.0, %v139
    %v141 = vpop.f32.mrb[0].mxu0
    %v142 = vadd.f32 0.0, %v141
    %v143 = vpop.f32.mrb[0].mxu0
    %v144 = vadd.f32 0.0, %v143
    %145 = vmatprep.mubr.bf16.mxu0 0
    %146 = vmatmul.mubr.bf16.gmra.mrb[0].mxu0 %v78
    %v147 = vpop.f32.mrb[0].mxu0
    %v148 = vadd.f32 0.0, %v147
    %v149 = vpop.f32.mrb[0].mxu0
    %v150 = vadd.f32 0.0, %v149
    %v151 = vpop.f32.mrb[0].mxu0
    %v152 = vadd.f32 0.0, %v151
    %v153 = vpop.f32.mrb[0].mxu0
    %v154 = vadd.f32 0.0, %v153
    %155 = vmatprep.mubr.bf16.mxu0 0
    %156 = vmatmul.mubr.bf16.gmra.mrb[0].mxu0 %v81
    %v157 = vpop.f32.mrb[0].mxu0
    %v158 = vadd.f32 0.0, %v157
    %v159 = vpop.f32.mrb[0].mxu0
    %v160 = vadd.f32 0.0, %v159
    %v161 = vpop.f32.mrb[0].mxu0
    %v162 = vadd.f32 0.0, %v161
    %v163 = vpop.f32.mrb[0].mxu0
    %v164 = vadd.f32 0.0, %v163
    %165 = vdwg.mxu0
    %v166 = vpack.c.bf16 %v122, %v118
    %v167 = vpack.c.bf16 %v124, %v120
    %v168 = vpack.c.bf16 %v132, %v128
    %v169 = vpack.c.bf16 %v134, %v130
    %v170 = vpack.c.bf16 %v142, %v138
    %v171 = vpack.c.bf16 %v144, %v140
    %v172 = vpack.c.bf16 %v152, %v148
    %v173 = vpack.c.bf16 %v154, %v150
    %v174 = vpack.c.bf16 %v162, %v158
    %v175 = vpack.c.bf16 %v164, %v160
    %v176 = vld [vmem:[%s3] sm:$0xf]
    %v177 = vld [vmem:[%s3 + $0x4] sm:$0xf]
    %v178 = vld [vmem:[%s3 + $0x8] sm:$0xf]
    %v179 = vld [vmem:[%s3 + $0xc] sm:$0xf]
    %v180 = vld [vmem:[%s1] sm:$0x1]
    %181 = vxpose.xlu0.c.b16.start [1/8] %v166, 128
    %182 = vxpose.xlu0.c.b16.cont [2/8] 0, 128
    %183 = vxpose.xlu0.c.b16.cont [3/8] 0, 128
    %184 = vxpose.xlu0.c.b16.cont [4/8] 0, 128
    %185 = vxpose.xlu0.c.b16.cont [5/8] 0, 128
    %186 = vxpose.xlu0.c.b16.cont [6/8] 0, 128
    %187 = vxpose.xlu0.c.b16.cont [7/8] 0, 128
    %188 = vxpose.xlu0.c.b16.end [8/8] 0, 128
    %v189 = vpop.trf.xlu0
    %v190 = vpop.trf.xlu0
    %v191 = vpop.trf.xlu0
    %v192 = vpop.trf.xlu0
    %v193 = vpop.trf.xlu0
    %v194 = vpop.trf.xlu0
    %v195 = vpop.trf.xlu0
    %v196 = vpop.trf.xlu0
    %vm197 = vcmask 130048
    %v199 = vsel %vm197, %v189, 0
    %v202 = vsel %vm197, %v190, 0
    %v205 = vsel %vm197, %v191, 0
    %v208 = vsel %vm197, %v192, 0
    %v211 = vsel %vm197, %v193, 0
    %v214 = vsel %vm197, %v194, 0
    %v217 = vsel %vm197, %v195, 0
    %v220 = vsel %vm197, %v196, 0
    %222 = vmatprep.subr.bf16.mxu0 0
    %223 = vmatpush1.bf16.msra.mxu0 %v170
    %224 = vmatprep.subr.bf16.mxu0 0
    %225 = vmatpush1.bf16.msra.mxu0 0
    %226 = vmatprep.subr.bf16.mxu0 0
    %227 = vmatpush1.bf16.msra.mxu0 0
    %228 = vmatprep.subr.bf16.mxu0 0
    %229 = vmatpush1.bf16.msra.mxu0 0
    %230 = vmatprep.subr.bf16.mxu0 0
    %231 = vmatpush1.bf16.msra.mxu0 0
    %232 = vmatprep.subr.bf16.mxu0 0
    %233 = vmatpush1.bf16.msra.mxu0 0
    %234 = vmatprep.subr.bf16.mxu0 0
    %235 = vmatpush1.bf16.msra.mxu0 0
    %236 = vmatprep.subr.bf16.mxu0 0
    %237 = vmatpush1.bf16.msra.mxu0 0
    %238 = vmatprep.subr.bf16.mxu0 0
    %239 = vmatpush1.bf16.msra.mxu0 0
    %240 = vmatprep.subr.bf16.mxu0 0
    %241 = vmatpush1.bf16.msra.mxu0 0
    %242 = vmatprep.subr.bf16.mxu0 0
    %243 = vmatpush1.bf16.msra.mxu0 0
    %244 = vmatprep.subr.bf16.mxu0 0
    %245 = vmatpush1.bf16.msra.mxu0 0
    %246 = vmatprep.subr.bf16.mxu0 0
    %247 = vmatpush1.bf16.msra.mxu0 0
    %248 = vmatprep.subr.bf16.mxu0 0
    %249 = vmatpush1.bf16.msra.mxu0 0
    %250 = vmatprep.subr.bf16.mxu0 0
    %251 = vmatpush1.bf16.msra.mxu0 0
    %252 = vmatprep.subr.bf16.mxu0 0
    %253 = vmatpush1.bf16.msra.mxu0 0
    %254 = vmatprep.mubr.bf16.mxu0 0
    %255 = vmatmul.mubr.bf16.gmra.mrb[0].mxu0 %v199
    %v256 = vpop.f32.mrb[0].mxu0
    %v257 = vadd.f32 0.0, %v256
    %v258 = vpop.f32.mrb[0].mxu0
    %v259 = vpop.f32.mrb[0].mxu0
    %v260 = vadd.f32 0.0, %v259
    %v261 = vpop.f32.mrb[0].mxu0
    %262 = vmatprep.mubr.bf16.mxu0 0
    %263 = vmatmul.mubr.bf16.gmra.mrb[0].mxu0 %v202
    %v264 = vpop.f32.mrb[0].mxu0
    %v265 = vadd.f32 0.0, %v264
    %v266 = vpop.f32.mrb[0].mxu0
    %v267 = vpop.f32.mrb[0].mxu0
    %v268 = vadd.f32 0.0, %v267
    %v269 = vpop.f32.mrb[0].mxu0
    %270 = vmatprep.mubr.bf16.mxu0 0
    %271 = vmatmul.mubr.bf16.gmra.mrb[0].mxu0 %v205
    %v272 = vpop.f32.mrb[0].mxu0
    %v273 = vadd.f32 0.0, %v272
    %v274 = vpop.f32.mrb[0].mxu0
    %v275 = vpop.f32.mrb[0].mxu0
    %v276 = vadd.f32 0.0, %v275
    %v277 = vpop.f32.mrb[0].mxu0
    %278 = vmatprep.mubr.bf16.mxu0 0
    %279 = vmatmul.mubr.bf16.gmra.mrb[0].mxu0 %v208
    %v280 = vpop.f32.mrb[0].mxu0
    %v281 = vadd.f32 0.0, %v280
    %v282 = vpop.f32.mrb[0].mxu0
    %v283 = vpop.f32.mrb[0].mxu0
    %v284 = vadd.f32 0.0, %v283
    %v285 = vpop.f32.mrb[0].mxu0
    %286 = vmatprep.mubr.bf16.mxu0 0
    %287 = vmatmul.mubr.bf16.gmra.mrb[0].mxu0 %v211
    %v288 = vpop.f32.mrb[0].mxu0
    %v289 = vadd.f32 0.0, %v288
    %v290 = vpop.f32.mrb[0].mxu0
    %v291 = vpop.f32.mrb[0].mxu0
    %v292 = vadd.f32 0.0, %v291
    %v293 = vpop.f32.mrb[0].mxu0
    %294 = vmatprep.mubr.bf16.mxu0 0
    %295 = vmatmul.mubr.bf16.gmra.mrb[0].mxu0 %v214
    %v296 = vpop.f32.mrb[0].mxu0
    %v297 = vadd.f32 0.0, %v296
    %v298 = vpop.f32.mrb[0].mxu0
    %v299 = vpop.f32.mrb[0].mxu0
    %v300 = vadd.f32 0.0, %v299
    %v301 = vpop.f32.mrb[0].mxu0
    %302 = vmatprep.mubr.bf16.mxu0 0
    %303 = vmatmul.mubr.bf16.gmra.mrb[0].mxu0 %v217
    %v304 = vpop.f32.mrb[0].mxu0
    %v305 = vadd.f32 0.0, %v304
    %v306 = vpop.f32.mrb[0].mxu0
    %v307 = vpop.f32.mrb[0].mxu0
    %v308 = vadd.f32 0.0, %v307
    %v309 = vpop.f32.mrb[0].mxu0
    %310 = vmatprep.mubr.bf16.mxu0 0
    %311 = vmatmul.mubr.bf16.gmra.mrb[0].mxu0 %v220
    %v312 = vpop.f32.mrb[0].mxu0
    %v313 = vadd.f32 0.0, %v312
    %v314 = vpop.f32.mrb[0].mxu0
    %v315 = vpop.f32.mrb[0].mxu0
    %v316 = vadd.f32 0.0, %v315
    %v317 = vpop.f32.mrb[0].mxu0
    %318 = vdwg.mxu0
    %v320 = vlaneseq
    %v321 = vshrl.u32 %v320, 7
    %v322 = vsub.s32 0, %v321
    %v323 = vrot.slane %v180, %v322
    %v325 = vsub.f32 %v257, %v323
    %v326 = vsub.f32 %v260, %v323
    %v327 = vsub.f32 %v265, %v323
    %v328 = vsub.f32 %v268, %v323
    %v329 = vsub.f32 %v273, %v323
    %v330 = vsub.f32 %v276, %v323
    %v331 = vsub.f32 %v281, %v323
    %v332 = vsub.f32 %v284, %v323
    %v333 = vsub.f32 %v289, %v323
    %v334 = vsub.f32 %v292, %v323
    %v335 = vsub.f32 %v297, %v323
    %v336 = vsub.f32 %v300, %v323
    %v337 = vsub.f32 %v305, %v323
    %v338 = vsub.f32 %v308, %v323
    %v339 = vsub.f32 %v313, %v323
    %v340 = vsub.f32 %v316, %v323
    %341 = vmax.xlane.f32.xlu0 %v325
    %v342 = vpop.xlane.xlu0 %341
    %343 = vmax.xlane.f32.xlu0 %v326
    %v344 = vpop.xlane.xlu0 %343
    %345 = vmax.xlane.f32.xlu0 %v327
    %v346 = vpop.xlane.xlu0 %345
    %347 = vmax.xlane.f32.xlu0 %v328
    %v348 = vpop.xlane.xlu0 %347
    %349 = vmax.xlane.f32.xlu0 %v329
    %v350 = vpop.xlane.xlu0 %349
    %351 = vmax.xlane.f32.xlu0 %v330
    %v352 = vpop.xlane.xlu0 %351
    %353 = vmax.xlane.f32.xlu0 %v331
    %v354 = vpop.xlane.xlu0 %353
    %355 = vmax.xlane.f32.xlu0 %v332
    %v356 = vpop.xlane.xlu0 %355
    %357 = vmax.xlane.f32.xlu0 %v333
    %v358 = vpop.xlane.xlu0 %357
    %359 = vmax.xlane.f32.xlu0 %v334
    %v360 = vpop.xlane.xlu0 %359
    %361 = vmax.xlane.f32.xlu0 %v335
    %v362 = vpop.xlane.xlu0 %361
    %363 = vmax.xlane.f32.xlu0 %v336
    %v364 = vpop.xlane.xlu0 %363
    %365 = vmax.xlane.f32.xlu0 %v337
    %v366 = vpop.xlane.xlu0 %365
    %367 = vmax.xlane.f32.xlu0 %v338
    %v368 = vpop.xlane.xlu0 %367
    %369 = vmax.xlane.f32.xlu0 %v339
    %v370 = vpop.xlane.xlu0 %369
    %371 = vmax.xlane.f32.xlu0 %v340
    %v372 = vpop.xlane.xlu0 %371
    %v373 = vsub.f32 %v325, %v342
    %v374 = vsub.f32 %v326, %v344
    %v375 = vsub.f32 %v327, %v346
    %v376 = vsub.f32 %v328, %v348
    %v377 = vsub.f32 %v329, %v350
    %v378 = vsub.f32 %v330, %v352
    %v379 = vsub.f32 %v331, %v354
    %v380 = vsub.f32 %v332, %v356
    %v381 = vsub.f32 %v333, %v358
    %v382 = vsub.f32 %v334, %v360
    %v383 = vsub.f32 %v335, %v362
    %v384 = vsub.f32 %v336, %v364
    %v385 = vsub.f32 %v337, %v366
    %v386 = vsub.f32 %v338, %v368
    %v387 = vsub.f32 %v339, %v370
    %v388 = vsub.f32 %v340, %v372
    %v389 = vmul.f32 %v373, 1.442695
    %v390 = vpow.pop %v389
    %v391 = vmul.f32 %v374, 1.442695
    %v392 = vpow.pop %v391
    %v393 = vmul.f32 %v375, 1.442695
    %v394 = vpow.pop %v393
    %v395 = vmul.f32 %v376, 1.442695
    %v396 = vpow.pop %v395
    %v397 = vmul.f32 %v377, 1.442695
    %v398 = vpow.pop %v397
    %v399 = vmul.f32 %v378, 1.442695
    %v400 = vpow.pop %v399
    %v401 = vmul.f32 %v379, 1.442695
    %v402 = vpow.pop %v401
    %v403 = vmul.f32 %v380, 1.442695
    %v404 = vpow.pop %v403
    %v405 = vmul.f32 %v381, 1.442695
    %v406 = vpow.pop %v405
    %v407 = vmul.f32 %v382, 1.442695
    %v408 = vpow.pop %v407
    %v409 = vmul.f32 %v383, 1.442695
    %v410 = vpow.pop %v409
    %v411 = vmul.f32 %v384, 1.442695
    %v412 = vpow.pop %v411
    %v413 = vmul.f32 %v385, 1.442695
    %v414 = vpow.pop %v413
    %v415 = vmul.f32 %v386, 1.442695
    %v416 = vpow.pop %v415
    %v417 = vmul.f32 %v387, 1.442695
    %v418 = vpow.pop %v417
    %v419 = vmul.f32 %v388, 1.442695
    %v420 = vpow.pop %v419
    %v421 = vpack.c.bf16 %v392, %v390
    %v422 = vpack.c.bf16 %v396, %v394
    %v423 = vpack.c.bf16 %v400, %v398
    %v424 = vpack.c.bf16 %v404, %v402
    %v425 = vpack.c.bf16 %v408, %v406
    %v426 = vpack.c.bf16 %v412, %v410
    %v427 = vpack.c.bf16 %v416, %v414
    %v428 = vpack.c.bf16 %v420, %v418
    %429 = vmatprep.subr.bf16.mxu0 0
    %430 = vmatpush1.bf16.xpose.msra.mxu0 %v421
    %431 = vmatprep.subr.bf16.mxu0 0
    %432 = vmatpush1.bf16.xpose.msra.mxu0 %v422
    %433 = vmatprep.subr.bf16.mxu0 0
    %434 = vmatpush1.bf16.xpose.msra.mxu0 %v423
    %435 = vmatprep.subr.bf16.mxu0 0
    %436 = vmatpush1.bf16.xpose.msra.mxu0 %v424
    %437 = vmatprep.subr.bf16.mxu0 0
    %438 = vmatpush1.bf16.xpose.msra.mxu0 %v425
    %439 = vmatprep.subr.bf16.mxu0 0
    %440 = vmatpush1.bf16.xpose.msra.mxu0 %v426
    %441 = vmatprep.subr.bf16.mxu0 0
    %442 = vmatpush1.bf16.xpose.msra.mxu0 %v427
    %443 = vmatprep.subr.bf16.mxu0 0
    %444 = vmatpush1.bf16.xpose.msra.mxu0 %v428
    %445 = vmatprep.subr.bf16.mxu0 0
    %446 = vmatpush1.bf16.xpose.msra.mxu0 0
    %447 = vmatprep.subr.bf16.mxu0 0
    %448 = vmatpush1.bf16.xpose.msra.mxu0 0
    %449 = vmatprep.subr.bf16.mxu0 0
    %450 = vmatpush1.bf16.xpose.msra.mxu0 0
    %451 = vmatprep.subr.bf16.mxu0 0
    %452 = vmatpush1.bf16.xpose.msra.mxu0 0
    %453 = vmatprep.subr.bf16.mxu0 0
    %454 = vmatpush1.bf16.xpose.msra.mxu0 0
    %455 = vmatprep.subr.bf16.mxu0 0
    %456 = vmatpush1.bf16.xpose.msra.mxu0 0
    %457 = vmatprep.subr.bf16.mxu0 0
    %458 = vmatpush1.bf16.xpose.msra.mxu0 0
    %459 = vmatprep.subr.bf16.mxu0 0
    %460 = vmatpush1.bf16.xpose.msra.mxu0 0
    %461 = vmatprep.mubr.bf16.mxu0 0
    %462 = vmatmul.mubr.bf16.gmra.mrb[0].mxu0 %v172
    %v463 = vpop.f32.mrb[0].mxu0
    %v464 = vadd.f32 0.0, %v463
    %v465 = vpop.f32.mrb[0].mxu0
    %v466 = vpop.f32.mrb[0].mxu0
    %v467 = vadd.f32 0.0, %v466
    %v468 = vpop.f32.mrb[0].mxu0
    %469 = vdwg.mxu0
    %470 = vmatprep.subr.bf16.mxu0 0
    %471 = vmatpush1.bf16.xpose.msra.mxu0 %v421
    %472 = vmatprep.subr.bf16.mxu0 0
    %473 = vmatpush1.bf16.xpose.msra.mxu0 %v422
    %474 = vmatprep.subr.bf16.mxu0 0
    %475 = vmatpush1.bf16.xpose.msra.mxu0 %v423
    %476 = vmatprep.subr.bf16.mxu0 0
    %477 = vmatpush1.bf16.xpose.msra.mxu0 %v424
    %478 = vmatprep.subr.bf16.mxu0 0
    %479 = vmatpush1.bf16.xpose.msra.mxu0 %v425
    %480 = vmatprep.subr.bf16.mxu0 0
    %481 = vmatpush1.bf16.xpose.msra.mxu0 %v426
    %482 = vmatprep.subr.bf16.mxu0 0
    %483 = vmatpush1.bf16.xpose.msra.mxu0 %v427
    %484 = vmatprep.subr.bf16.mxu0 0
    %485 = vmatpush1.bf16.xpose.msra.mxu0 %v428
    %486 = vmatprep.subr.bf16.mxu0 0
    %487 = vmatpush1.bf16.xpose.msra.mxu0 0
    %488 = vmatprep.subr.bf16.mxu0 0
    %489 = vmatpush1.bf16.xpose.msra.mxu0 0
    %490 = vmatprep.subr.bf16.mxu0 0
    %491 = vmatpush1.bf16.xpose.msra.mxu0 0
    %492 = vmatprep.subr.bf16.mxu0 0
    %493 = vmatpush1.bf16.xpose.msra.mxu0 0
    %494 = vmatprep.subr.bf16.mxu0 0
    %495 = vmatpush1.bf16.xpose.msra.mxu0 0
    %496 = vmatprep.subr.bf16.mxu0 0
    %497 = vmatpush1.bf16.xpose.msra.mxu0 0
    %498 = vmatprep.subr.bf16.mxu0 0
    %499 = vmatpush1.bf16.xpose.msra.mxu0 0
    %500 = vmatprep.subr.bf16.mxu0 0
    %501 = vmatpush1.bf16.xpose.msra.mxu0 0
    %502 = vmatprep.mubr.bf16.mxu0 0
    %503 = vmatmul.mubr.bf16.gmra.mrb[0].mxu0 1065369472
    %v504 = vpop.f32.mrb[0].mxu0
    %v505 = vadd.f32 0.0, %v504
    %v506 = vpop.f32.mrb[0].mxu0
    %v507 = vpop.f32.mrb[0].mxu0
    %v508 = vpop.f32.mrb[0].mxu0
    %509 = vdwg.mxu0
    %v510 = vrcp.pop %v505
    %v511 = vlaneseq
    %v512 = vshrl.u32 %v511, 7
    %v513 = vsub.s32 0, %v512
    %v514 = vrot.slane %v510, %v513
    %v515 = vmul.f32 %v464, %v514
    %v516 = vmul.f32 %v467, %v514
    %v517 = vadd.f32 %v515, 0.0
    %v518 = vadd.f32 %v516, 0.0
    %519 = vxpose.xlu0.c.b16.start [1/8] %v168, 128
    %520 = vxpose.xlu0.c.b16.cont [2/8] 0, 128
    %521 = vxpose.xlu0.c.b16.cont [3/8] 0, 128
    %522 = vxpose.xlu0.c.b16.cont [4/8] 0, 128
    %523 = vxpose.xlu0.c.b16.cont [5/8] 0, 128
    %524 = vxpose.xlu0.c.b16.cont [6/8] 0, 128
    %525 = vxpose.xlu0.c.b16.cont [7/8] 0, 128
    %526 = vxpose.xlu0.c.b16.end [8/8] 0, 128
    %v527 = vpop.trf.xlu0
    %v528 = vpop.trf.xlu0
    %v529 = vpop.trf.xlu0
    %v530 = vpop.trf.xlu0
    %v531 = vpop.trf.xlu0
    %v532 = vpop.trf.xlu0
    %v533 = vpop.trf.xlu0
    %v534 = vpop.trf.xlu0
    %v536 = vsel %vm197, %v527, 0
    %v539 = vsel %vm197, %v528, 0
    %v542 = vsel %vm197, %v529, 0
    %v545 = vsel %vm197, %v530, 0
    %v548 = vsel %vm197, %v531, 0
    %v551 = vsel %vm197, %v532, 0
    %v554 = vsel %vm197, %v533, 0
    %v557 = vsel %vm197, %v534, 0
    %559 = vmatprep.subr.bf16.mxu0 0
    %560 = vmatpush1.bf16.msra.mxu0 %v170
    %561 = vmatprep.subr.bf16.mxu0 0
    %562 = vmatpush1.bf16.msra.mxu0 0
    %563 = vmatprep.subr.bf16.mxu0 0
    %564 = vmatpush1.bf16.msra.mxu0 0
    %565 = vmatprep.subr.bf16.mxu0 0
    %566 = vmatpush1.bf16.msra.mxu0 0
    %567 = vmatprep.subr.bf16.mxu0 0
    %568 = vmatpush1.bf16.msra.mxu0 0
    %569 = vmatprep.subr.bf16.mxu0 0
    %570 = vmatpush1.bf16.msra.mxu0 0
    %571 = vmatprep.subr.bf16.mxu0 0
    %572 = vmatpush1.bf16.msra.mxu0 0
    %573 = vmatprep.subr.bf16.mxu0 0
    %574 = vmatpush1.bf16.msra.mxu0 0
    %575 = vmatprep.subr.bf16.mxu0 0
    %576 = vmatpush1.bf16.msra.mxu0 0
    %577 = vmatprep.subr.bf16.mxu0 0
    %578 = vmatpush1.bf16.msra.mxu0 0
    %579 = vmatprep.subr.bf16.mxu0 0
    %580 = vmatpush1.bf16.msra.mxu0 0
    %581 = vmatprep.subr.bf16.mxu0 0
    %582 = vmatpush1.bf16.msra.mxu0 0
    %583 = vmatprep.subr.bf16.mxu0 0
    %584 = vmatpush1.bf16.msra.mxu0 0
    %585 = vmatprep.subr.bf16.mxu0 0
    %586 = vmatpush1.bf16.msra.mxu0 0
    %587 = vmatprep.subr.bf16.mxu0 0
    %588 = vmatpush1.bf16.msra.mxu0 0
    %589 = vmatprep.subr.bf16.mxu0 0
    %590 = vmatpush1.bf16.msra.mxu0 0
    %591 = vmatprep.mubr.bf16.mxu0 0
    %592 = vmatmul.mubr.bf16.gmra.mrb[0].mxu0 %v536
    %v593 = vpop.f32.mrb[0].mxu0
    %v594 = vadd.f32 0.0, %v593
    %v595 = vpop.f32.mrb[0].mxu0
    %v596 = vpop.f32.mrb[0].mxu0
    %v597 = vadd.f32 0.0, %v596
    %v598 = vpop.f32.mrb[0].mxu0
    %599 = vmatprep.mubr.bf16.mxu0 0
    %600 = vmatmul.mubr.bf16.gmra.mrb[0].mxu0 %v539
    %v601 = vpop.f32.mrb[0].mxu0
    %v602 = vadd.f32 0.0, %v601
    %v603 = vpop.f32.mrb[0].mxu0
    %v604 = vpop.f32.mrb[0].mxu0
    %v605 = vadd.f32 0.0, %v604
    %v606 = vpop.f32.mrb[0].mxu0
    %607 = vmatprep.mubr.bf16.mxu0 0
    %608 = vmatmul.mubr.bf16.gmra.mrb[0].mxu0 %v542
    %v609 = vpop.f32.mrb[0].mxu0
    %v610 = vadd.f32 0.0, %v609
    %v611 = vpop.f32.mrb[0].mxu0
    %v612 = vpop.f32.mrb[0].mxu0
    %v613 = vadd.f32 0.0, %v612
    %v614 = vpop.f32.mrb[0].mxu0
    %615 = vmatprep.mubr.bf16.mxu0 0
    %616 = vmatmul.mubr.bf16.gmra.mrb[0].mxu0 %v545
    %v617 = vpop.f32.mrb[0].mxu0
    %v618 = vadd.f32 0.0, %v617
    %v619 = vpop.f32.mrb[0].mxu0
    %v620 = vpop.f32.mrb[0].mxu0
    %v621 = vadd.f32 0.0, %v620
    %v622 = vpop.f32.mrb[0].mxu0
    %623 = vmatprep.mubr.bf16.mxu0 0
    %624 = vmatmul.mubr.bf16.gmra.mrb[0].mxu0 %v548
    %v625 = vpop.f32.mrb[0].mxu0
    %v626 = vadd.f32 0.0, %v625
    %v627 = vpop.f32.mrb[0].mxu0
    %v628 = vpop.f32.mrb[0].mxu0
    %v629 = vadd.f32 0.0, %v628
    %v630 = vpop.f32.mrb[0].mxu0
    %631 = vmatprep.mubr.bf16.mxu0 0
    %632 = vmatmul.mubr.bf16.gmra.mrb[0].mxu0 %v551
    %v633 = vpop.f32.mrb[0].mxu0
    %v634 = vadd.f32 0.0, %v633
    %v635 = vpop.f32.mrb[0].mxu0
    %v636 = vpop.f32.mrb[0].mxu0
    %v637 = vadd.f32 0.0, %v636
    %v638 = vpop.f32.mrb[0].mxu0
    %639 = vmatprep.mubr.bf16.mxu0 0
    %640 = vmatmul.mubr.bf16.gmra.mrb[0].mxu0 %v554
    %v641 = vpop.f32.mrb[0].mxu0
    %v642 = vadd.f32 0.0, %v641
    %v643 = vpop.f32.mrb[0].mxu0
    %v644 = vpop.f32.mrb[0].mxu0
    %v645 = vadd.f32 0.0, %v644
    %v646 = vpop.f32.mrb[0].mxu0
    %647 = vmatprep.mubr.bf16.mxu0 0
    %648 = vmatmul.mubr.bf16.gmra.mrb[0].mxu0 %v557
    %v649 = vpop.f32.mrb[0].mxu0
    %v650 = vadd.f32 0.0, %v649
    %v651 = vpop.f32.mrb[0].mxu0
    %v652 = vpop.f32.mrb[0].mxu0
    %v653 = vadd.f32 0.0, %v652
    %v654 = vpop.f32.mrb[0].mxu0
    %655 = vdwg.mxu0
    %v656 = vsub.f32 %v594, %v323
    %v657 = vsub.f32 %v597, %v323
    %v658 = vsub.f32 %v602, %v323
    %v659 = vsub.f32 %v605, %v323
    %v660 = vsub.f32 %v610, %v323
    %v661 = vsub.f32 %v613, %v323
    %v662 = vsub.f32 %v618, %v323
    %v663 = vsub.f32 %v621, %v323
    %v664 = vsub.f32 %v626, %v323
    %v665 = vsub.f32 %v629, %v323
    %v666 = vsub.f32 %v634, %v323
    %v667 = vsub.f32 %v637, %v323
    %v668 = vsub.f32 %v642, %v323
    %v669 = vsub.f32 %v645, %v323
    %v670 = vsub.f32 %v650, %v323
    %v671 = vsub.f32 %v653, %v323
    %672 = vmax.xlane.f32.xlu0 %v656
    %v673 = vpop.xlane.xlu0 %672
    %674 = vmax.xlane.f32.xlu0 %v657
    %v675 = vpop.xlane.xlu0 %674
    %676 = vmax.xlane.f32.xlu0 %v658
    %v677 = vpop.xlane.xlu0 %676
    %678 = vmax.xlane.f32.xlu0 %v659
    %v679 = vpop.xlane.xlu0 %678
    %680 = vmax.xlane.f32.xlu0 %v660
    %v681 = vpop.xlane.xlu0 %680
    %682 = vmax.xlane.f32.xlu0 %v661
    %v683 = vpop.xlane.xlu0 %682
    %684 = vmax.xlane.f32.xlu0 %v662
    %v685 = vpop.xlane.xlu0 %684
    %686 = vmax.xlane.f32.xlu0 %v663
    %v687 = vpop.xlane.xlu0 %686
    %688 = vmax.xlane.f32.xlu0 %v664
    %v689 = vpop.xlane.xlu0 %688
    %690 = vmax.xlane.f32.xlu0 %v665
    %v691 = vpop.xlane.xlu0 %690
    %692 = vmax.xlane.f32.xlu0 %v666
    %v693 = vpop.xlane.xlu0 %692
    %694 = vmax.xlane.f32.xlu0 %v667
    %v695 = vpop.xlane.xlu0 %694
    %696 = vmax.xlane.f32.xlu0 %v668
    %v697 = vpop.xlane.xlu0 %696
    %698 = vmax.xlane.f32.xlu0 %v669
    %v699 = vpop.xlane.xlu0 %698
    %700 = vmax.xlane.f32.xlu0 %v670
    %v701 = vpop.xlane.xlu0 %700
    %702 = vmax.xlane.f32.xlu0 %v671
    %v703 = vpop.xlane.xlu0 %702
    %v704 = vsub.f32 %v656, %v673
    %v705 = vsub.f32 %v657, %v675
    %v706 = vsub.f32 %v658, %v677
    %v707 = vsub.f32 %v659, %v679
    %v708 = vsub.f32 %v660, %v681
    %v709 = vsub.f32 %v661, %v683
    %v710 = vsub.f32 %v662, %v685
    %v711 = vsub.f32 %v663, %v687
    %v712 = vsub.f32 %v664, %v689
    %v713 = vsub.f32 %v665, %v691
    %v714 = vsub.f32 %v666, %v693
    %v715 = vsub.f32 %v667, %v695
    %v716 = vsub.f32 %v668, %v697
    %v717 = vsub.f32 %v669, %v699
    %v718 = vsub.f32 %v670, %v701
    %v719 = vsub.f32 %v671, %v703
    %v720 = vmul.f32 %v704, 1.442695
    %v721 = vpow.pop %v720
    %v722 = vmul.f32 %v705, 1.442695
    %v723 = vpow.pop %v722
    %v724 = vmul.f32 %v706, 1.442695
    %v725 = vpow.pop %v724
    %v726 = vmul.f32 %v707, 1.442695
    %v727 = vpow.pop %v726
    %v728 = vmul.f32 %v708, 1.442695
    %v729 = vpow.pop %v728
    %v730 = vmul.f32 %v709, 1.442695
    %v731 = vpow.pop %v730
    %v732 = vmul.f32 %v710, 1.442695
    %v733 = vpow.pop %v732
    %v734 = vmul.f32 %v711, 1.442695
    %v735 = vpow.pop %v734
    %v736 = vmul.f32 %v712, 1.442695
    %v737 = vpow.pop %v736
    %v738 = vmul.f32 %v713, 1.442695
    %v739 = vpow.pop %v738
    %v740 = vmul.f32 %v714, 1.442695
    %v741 = vpow.pop %v740
    %v742 = vmul.f32 %v715, 1.442695
    %v743 = vpow.pop %v742
    %v744 = vmul.f32 %v716, 1.442695
    %v745 = vpow.pop %v744
    %v746 = vmul.f32 %v717, 1.442695
    %v747 = vpow.pop %v746
    %v748 = vmul.f32 %v718, 1.442695
    %v749 = vpow.pop %v748
    %v750 = vmul.f32 %v719, 1.442695
    %v751 = vpow.pop %v750
    %v752 = vpack.c.bf16 %v723, %v721
    %v753 = vpack.c.bf16 %v727, %v725
    %v754 = vpack.c.bf16 %v731, %v729
    %v755 = vpack.c.bf16 %v735, %v733
    %v756 = vpack.c.bf16 %v739, %v737
    %v757 = vpack.c.bf16 %v743, %v741
    %v758 = vpack.c.bf16 %v747, %v745
    %v759 = vpack.c.bf16 %v751, %v749
    %760 = vmatprep.subr.bf16.mxu0 0
    %761 = vmatpush1.bf16.xpose.msra.mxu0 %v752
    %762 = vmatprep.subr.bf16.mxu0 0
    %763 = vmatpush1.bf16.xpose.msra.mxu0 %v753
    %764 = vmatprep.subr.bf16.mxu0 0
    %765 = vmatpush1.bf16.xpose.msra.mxu0 %v754
    %766 = vmatprep.subr.bf16.mxu0 0
    %767 = vmatpush1.bf16.xpose.msra.mxu0 %v755
    %768 = vmatprep.subr.bf16.mxu0 0
    %769 = vmatpush1.bf16.xpose.msra.mxu0 %v756
    %770 = vmatprep.subr.bf16.mxu0 0
    %771 = vmatpush1.bf16.xpose.msra.mxu0 %v757
    %772 = vmatprep.subr.bf16.mxu0 0
    %773 = vmatpush1.bf16.xpose.msra.mxu0 %v758
    %774 = vmatprep.subr.bf16.mxu0 0
    %775 = vmatpush1.bf16.xpose.msra.mxu0 %v759
    %776 = vmatprep.subr.bf16.mxu0 0
    %777 = vmatpush1.bf16.xpose.msra.mxu0 0
    %778 = vmatprep.subr.bf16.mxu0 0
    %779 = vmatpush1.bf16.xpose.msra.mxu0 0
    %780 = vmatprep.subr.bf16.mxu0 0
    %781 = vmatpush1.bf16.xpose.msra.mxu0 0
    %782 = vmatprep.subr.bf16.mxu0 0
    %783 = vmatpush1.bf16.xpose.msra.mxu0 0
    %784 = vmatprep.subr.bf16.mxu0 0
    %785 = vmatpush1.bf16.xpose.msra.mxu0 0
    %786 = vmatprep.subr.bf16.mxu0 0
    %787 = vmatpush1.bf16.xpose.msra.mxu0 0
    %788 = vmatprep.subr.bf16.mxu0 0
    %789 = vmatpush1.bf16.xpose.msra.mxu0 0
    %790 = vmatprep.subr.bf16.mxu0 0
    %791 = vmatpush1.bf16.xpose.msra.mxu0 0
    %792 = vmatprep.mubr.bf16.mxu0 0
    %793 = vmatmul.mubr.bf16.gmra.mrb[0].mxu0 %v174
    %v794 = vpop.f32.mrb[0].mxu0
    %v795 = vadd.f32 0.0, %v794
    %v796 = vpop.f32.mrb[0].mxu0
    %v797 = vpop.f32.mrb[0].mxu0
    %v798 = vadd.f32 0.0, %v797
    %v799 = vpop.f32.mrb[0].mxu0
    %800 = vdwg.mxu0
    %801 = vmatprep.subr.bf16.mxu0 0
    %802 = vmatpush1.bf16.xpose.msra.mxu0 %v752
    %803 = vmatprep.subr.bf16.mxu0 0
    %804 = vmatpush1.bf16.xpose.msra.mxu0 %v753
    %805 = vmatprep.subr.bf16.mxu0 0
    %806 = vmatpush1.bf16.xpose.msra.mxu0 %v754
    %807 = vmatprep.subr.bf16.mxu0 0
    %808 = vmatpush1.bf16.xpose.msra.mxu0 %v755
    %809 = vmatprep.subr.bf16.mxu0 0
    %810 = vmatpush1.bf16.xpose.msra.mxu0 %v756
    %811 = vmatprep.subr.bf16.mxu0 0
    %812 = vmatpush1.bf16.xpose.msra.mxu0 %v757
    %813 = vmatprep.subr.bf16.mxu0 0
    %814 = vmatpush1.bf16.xpose.msra.mxu0 %v758
    %815 = vmatprep.subr.bf16.mxu0 0
    %816 = vmatpush1.bf16.xpose.msra.mxu0 %v759
    %817 = vmatprep.subr.bf16.mxu0 0
    %818 = vmatpush1.bf16.xpose.msra.mxu0 0
    %819 = vmatprep.subr.bf16.mxu0 0
    %820 = vmatpush1.bf16.xpose.msra.mxu0 0
    %821 = vmatprep.subr.bf16.mxu0 0
    %822 = vmatpush1.bf16.xpose.msra.mxu0 0
    %823 = vmatprep.subr.bf16.mxu0 0
    %824 = vmatpush1.bf16.xpose.msra.mxu0 0
    %825 = vmatprep.subr.bf16.mxu0 0
    %826 = vmatpush1.bf16.xpose.msra.mxu0 0
    %827 = vmatprep.subr.bf16.mxu0 0
    %828 = vmatpush1.bf16.xpose.msra.mxu0 0
    %829 = vmatprep.subr.bf16.mxu0 0
    %830 = vmatpush1.bf16.xpose.msra.mxu0 0
    %831 = vmatprep.subr.bf16.mxu0 0
    %832 = vmatpush1.bf16.xpose.msra.mxu0 0
    %833 = vmatprep.mubr.bf16.mxu0 0
    %834 = vmatmul.mubr.bf16.gmra.mrb[0].mxu0 1065369472
    %v835 = vpop.f32.mrb[0].mxu0
    %v836 = vadd.f32 0.0, %v835
    %v837 = vpop.f32.mrb[0].mxu0
    %v838 = vpop.f32.mrb[0].mxu0
    %v839 = vpop.f32.mrb[0].mxu0
    %840 = vdwg.mxu0
    %v841 = vrcp.pop %v836
    %v842 = vlaneseq
    %v843 = vshrl.u32 %v842, 7
    %v844 = vsub.s32 0, %v843
    %v845 = vrot.slane %v841, %v844
    %v846 = vmul.f32 %v795, %v845
    %v847 = vmul.f32 %v798, %v845
    %v848 = vadd.f32 %v517, %v846
    %v849 = vadd.f32 %v518, %v847
    %v850 = vpack.c.bf16 %v849, %v848
    %v855 = vunpack.c.l.b16 %v176
    %v856 = vunpack.c.l.b16 %v177
    %v857 = vunpack.c.l.b16 %v178
    %v858 = vunpack.c.l.b16 %v179
    %v859 = vpack.c.b16 %v856, %v855
    %v860 = vpack.c.b16 %v858, %v857
    %v862 = vsel %vm197, %v859, 0
    %v865 = vsel %vm197, %v860, 0
    %867 = vmatprep.subr.bf16.mxu0 0
    %868 = vmatpush1.bf16.msra.mxu0 %v850
    %869 = vmatprep.subr.bf16.mxu0 0
    %870 = vmatpush1.bf16.msra.mxu0 0
    %871 = vmatprep.subr.bf16.mxu0 0
    %872 = vmatpush1.bf16.msra.mxu0 0
    %873 = vmatprep.subr.bf16.mxu0 0
    %874 = vmatpush1.bf16.msra.mxu0 0
    %875 = vmatprep.subr.bf16.mxu0 0
    %876 = vmatpush1.bf16.msra.mxu0 0
    %877 = vmatprep.subr.bf16.mxu0 0
    %878 = vmatpush1.bf16.msra.mxu0 0
    %879 = vmatprep.subr.bf16.mxu0 0
    %880 = vmatpush1.bf16.msra.mxu0 0
    %881 = vmatprep.subr.bf16.mxu0 0
    %882 = vmatpush1.bf16.msra.mxu0 0
    %883 = vmatprep.subr.bf16.mxu0 0
    %884 = vmatpush1.bf16.msra.mxu0 0
    %885 = vmatprep.subr.bf16.mxu0 0
    %886 = vmatpush1.bf16.msra.mxu0 0
    %887 = vmatprep.subr.bf16.mxu0 0
    %888 = vmatpush1.bf16.msra.mxu0 0
    %889 = vmatprep.subr.bf16.mxu0 0
    %890 = vmatpush1.bf16.msra.mxu0 0
    %891 = vmatprep.subr.bf16.mxu0 0
    %892 = vmatpush1.bf16.msra.mxu0 0
    %893 = vmatprep.subr.bf16.mxu0 0
    %894 = vmatpush1.bf16.msra.mxu0 0
    %895 = vmatprep.subr.bf16.mxu0 0
    %896 = vmatpush1.bf16.msra.mxu0 0
    %897 = vmatprep.subr.bf16.mxu0 0
    %898 = vmatpush1.bf16.msra.mxu0 0
    %899 = vmatprep.mubr.bf16.mxu0 0
    %900 = vmatmul.mubr.bf16.gmra.mrb[0].mxu0 %v862
    %v901 = vpop.f32.mrb[0].mxu0
    %v902 = vadd.f32 0.0, %v901
    %v903 = vpop.f32.mrb[0].mxu0
    %v904 = vpop.f32.mrb[0].mxu0
    %v905 = vadd.f32 0.0, %v904
    %v906 = vpop.f32.mrb[0].mxu0
    %907 = vmatprep.mubr.bf16.mxu0 0
    %908 = vmatmul.mubr.bf16.gmra.mrb[0].mxu0 %v865
    %v909 = vpop.f32.mrb[0].mxu0
    %v910 = vadd.f32 0.0, %v909
    %v911 = vpop.f32.mrb[0].mxu0
    %v912 = vpop.f32.mrb[0].mxu0
    %v913 = vadd.f32 0.0, %v912
    %v914 = vpop.f32.mrb[0].mxu0
    %915 = vdwg.mxu0
    %v916 = vld [vmem:[%s0] sm:$0xff]
    %v917 = vld [vmem:[%s0 + $0x10] sm:$0xff]
    %v918 = vld [vmem:[%s0 + $0x20] sm:$0xff]
    %v919 = vld [vmem:[%s0 + $0x30] sm:$0xff]
    %v920 = vadd.f32 %v916, %v902
    %v921 = vadd.f32 %v917, %v905
    %v922 = vadd.f32 %v918, %v910
    %v923 = vadd.f32 %v919, %v913
    %924 = vst [vmem:[#allocation2] sm:$0xff] %v920
    %925 = vst [vmem:[#allocation2 + $0x8] sm:$0xff] %v921
    %926 = vst [vmem:[#allocation2 + $0x10] sm:$0xff] %v922
    %927 = vst [vmem:[#allocation2 + $0x18] sm:$0xff] %v923
    %v928 = vld [vmem:[%s1 + $0x1] sm:$0x1]
    %929 = vxpose.xlu0.c.b16.start [1/8] %v167, 128
    %930 = vxpose.xlu0.c.b16.cont [2/8] 0, 128
    %931 = vxpose.xlu0.c.b16.cont [3/8] 0, 128
    %932 = vxpose.xlu0.c.b16.cont [4/8] 0, 128
    %933 = vxpose.xlu0.c.b16.cont [5/8] 0, 128
    %934 = vxpose.xlu0.c.b16.cont [6/8] 0, 128
    %935 = vxpose.xlu0.c.b16.cont [7/8] 0, 128
    %936 = vxpose.xlu0.c.b16.end [8/8] 0, 128
    %v937 = vpop.trf.xlu0
    %v938 = vpop.trf.xlu0
    %v939 = vpop.trf.xlu0
    %v940 = vpop.trf.xlu0
    %v941 = vpop.trf.xlu0
    %v942 = vpop.trf.xlu0
    %v943 = vpop.trf.xlu0
    %v944 = vpop.trf.xlu0
    %v946 = vsel %vm197, %v937, 0
    %v949 = vsel %vm197, %v938, 0
    %v952 = vsel %vm197, %v939, 0
    %v955 = vsel %vm197, %v940, 0
    %v958 = vsel %vm197, %v941, 0
    %v961 = vsel %vm197, %v942, 0
    %v964 = vsel %vm197, %v943, 0
    %v967 = vsel %vm197, %v944, 0
    %969 = vmatprep.subr.bf16.mxu0 0
    %970 = vmatpush1.bf16.msra.mxu0 %v171
    %971 = vmatprep.subr.bf16.mxu0 0
    %972 = vmatpush1.bf16.msra.mxu0 0
    %973 = vmatprep.subr.bf16.mxu0 0
    %974 = vmatpush1.bf16.msra.mxu0 0
    %975 = vmatprep.subr.bf16.mxu0 0
    %976 = vmatpush1.bf16.msra.mxu0 0
    %977 = vmatprep.subr.bf16.mxu0 0
    %978 = vmatpush1.bf16.msra.mxu0 0
    %979 = vmatprep.subr.bf16.mxu0 0
    %980 = vmatpush1.bf16.msra.mxu0 0
    %981 = vmatprep.subr.bf16.mxu0 0
    %982 = vmatpush1.bf16.msra.mxu0 0
    %983 = vmatprep.subr.bf16.mxu0 0
    %984 = vmatpush1.bf16.msra.mxu0 0
    %985 = vmatprep.subr.bf16.mxu0 0
    %986 = vmatpush1.bf16.msra.mxu0 0
    %987 = vmatprep.subr.bf16.mxu0 0
    %988 = vmatpush1.bf16.msra.mxu0 0
    %989 = vmatprep.subr.bf16.mxu0 0
    %990 = vmatpush1.bf16.msra.mxu0 0
    %991 = vmatprep.subr.bf16.mxu0 0
    %992 = vmatpush1.bf16.msra.mxu0 0
    %993 = vmatprep.subr.bf16.mxu0 0
    %994 = vmatpush1.bf16.msra.mxu0 0
    %995 = vmatprep.subr.bf16.mxu0 0
    %996 = vmatpush1.bf16.msra.mxu0 0
    %997 = vmatprep.subr.bf16.mxu0 0
    %998 = vmatpush1.bf16.msra.mxu0 0
    %999 = vmatprep.subr.bf16.mxu0 0
    %1000 = vmatpush1.bf16.msra.mxu0 0
    %1001 = vmatprep.mubr.bf16.mxu0 0
    %1002 = vmatmul.mubr.bf16.gmra.mrb[0].mxu0 %v946
    %v1003 = vpop.f32.mrb[0].mxu0
    %v1004 = vadd.f32 0.0, %v1003
    %v1005 = vpop.f32.mrb[0].mxu0
    %v1006 = vpop.f32.mrb[0].mxu0
    %v1007 = vadd.f32 0.0, %v1006
    %v1008 = vpop.f32.mrb[0].mxu0
    %1009 = vmatprep.mubr.bf16.mxu0 0
    %1010 = vmatmul.mubr.bf16.gmra.mrb[0].mxu0 %v949
    %v1011 = vpop.f32.mrb[0].mxu0
    %v1012 = vadd.f32 0.0, %v1011
    %v1013 = vpop.f32.mrb[0].mxu0
    %v1014 = vpop.f32.mrb[0].mxu0
    %v1015 = vadd.f32 0.0, %v1014
    %v1016 = vpop.f32.mrb[0].mxu0
    %1017 = vmatprep.mubr.bf16.mxu0 0
    %1018 = vmatmul.mubr.bf16.gmra.mrb[0].mxu0 %v952
    %v1019 = vpop.f32.mrb[0].mxu0
    %v1020 = vadd.f32 0.0, %v1019
    %v1021 = vpop.f32.mrb[0].mxu0
    %v1022 = vpop.f32.mrb[0].mxu0
    %v1023 = vadd.f32 0.0, %v1022
    %v1024 = vpop.f32.mrb[0].mxu0
    %1025 = vmatprep.mubr.bf16.mxu0 0
    %1026 = vmatmul.mubr.bf16.gmra.mrb[0].mxu0 %v955
    %v1027 = vpop.f32.mrb[0].mxu0
    %v1028 = vadd.f32 0.0, %v1027
    %v1029 = vpop.f32.mrb[0].mxu0
    %v1030 = vpop.f32.mrb[0].mxu0
    %v1031 = vadd.f32 0.0, %v1030
    %v1032 = vpop.f32.mrb[0].mxu0
    %1033 = vmatprep.mubr.bf16.mxu0 0
    %1034 = vmatmul.mubr.bf16.gmra.mrb[0].mxu0 %v958
    %v1035 = vpop.f32.mrb[0].mxu0
    %v1036 = vadd.f32 0.0, %v1035
    %v1037 = vpop.f32.mrb[0].mxu0
    %v1038 = vpop.f32.mrb[0].mxu0
    %v1039 = vadd.f32 0.0, %v1038
    %v1040 = vpop.f32.mrb[0].mxu0
    %1041 = vmatprep.mubr.bf16.mxu0 0
    %1042 = vmatmul.mubr.bf16.gmra.mrb[0].mxu0 %v961
    %v1043 = vpop.f32.mrb[0].mxu0
    %v1044 = vadd.f32 0.0, %v1043
    %v1045 = vpop.f32.mrb[0].mxu0
    %v1046 = vpop.f32.mrb[0].mxu0
    %v1047 = vadd.f32 0.0, %v1046
    %v1048 = vpop.f32.mrb[0].mxu0
    %1049 = vmatprep.mubr.bf16.mxu0 0
    %1050 = vmatmul.mubr.bf16.gmra.mrb[0].mxu0 %v964
    %v1051 = vpop.f32.mrb[0].mxu0
    %v1052 = vadd.f32 0.0, %v1051
    %v1053 = vpop.f32.mrb[0].mxu0
    %v1054 = vpop.f32.mrb[0].mxu0
    %v1055 = vadd.f32 0.0, %v1054
    %v1056 = vpop.f32.mrb[0].mxu0
    %1057 = vmatprep.mubr.bf16.mxu0 0
    %1058 = vmatmul.mubr.bf16.gmra.mrb[0].mxu0 %v967
    %v1059 = vpop.f32.mrb[0].mxu0
    %v1060 = vadd.f32 0.0, %v1059
    %v1061 = vpop.f32.mrb[0].mxu0
    %v1062 = vpop.f32.mrb[0].mxu0
    %v1063 = vadd.f32 0.0, %v1062
    %v1064 = vpop.f32.mrb[0].mxu0
    %1065 = vdwg.mxu0
    %v1067 = vlaneseq
    %v1068 = vshrl.u32 %v1067, 7
    %v1069 = vsub.s32 0, %v1068
    %v1070 = vrot.slane %v928, %v1069
    %v1072 = vsub.f32 %v1004, %v1070
    %v1073 = vsub.f32 %v1007, %v1070
    %v1074 = vsub.f32 %v1012, %v1070
    %v1075 = vsub.f32 %v1015, %v1070
    %v1076 = vsub.f32 %v1020, %v1070
    %v1077 = vsub.f32 %v1023, %v1070
    %v1078 = vsub.f32 %v1028, %v1070
    %v1079 = vsub.f32 %v1031, %v1070
    %v1080 = vsub.f32 %v1036, %v1070
    %v1081 = vsub.f32 %v1039, %v1070
    %v1082 = vsub.f32 %v1044, %v1070
    %v1083 = vsub.f32 %v1047, %v1070
    %v1084 = vsub.f32 %v1052, %v1070
    %v1085 = vsub.f32 %v1055, %v1070
    %v1086 = vsub.f32 %v1060, %v1070
    %v1087 = vsub.f32 %v1063, %v1070
    %1088 = vmax.xlane.f32.xlu0 %v1072
    %v1089 = vpop.xlane.xlu0 %1088
    %1090 = vmax.xlane.f32.xlu0 %v1073
    %v1091 = vpop.xlane.xlu0 %1090
    %1092 = vmax.xlane.f32.xlu0 %v1074
    %v1093 = vpop.xlane.xlu0 %1092
    %1094 = vmax.xlane.f32.xlu0 %v1075
    %v1095 = vpop.xlane.xlu0 %1094
    %1096 = vmax.xlane.f32.xlu0 %v1076
    %v1097 = vpop.xlane.xlu0 %1096
    %1098 = vmax.xlane.f32.xlu0 %v1077
    %v1099 = vpop.xlane.xlu0 %1098
    %1100 = vmax.xlane.f32.xlu0 %v1078
    %v1101 = vpop.xlane.xlu0 %1100
    %1102 = vmax.xlane.f32.xlu0 %v1079
    %v1103 = vpop.xlane.xlu0 %1102
    %1104 = vmax.xlane.f32.xlu0 %v1080
    %v1105 = vpop.xlane.xlu0 %1104
    %1106 = vmax.xlane.f32.xlu0 %v1081
    %v1107 = vpop.xlane.xlu0 %1106
    %1108 = vmax.xlane.f32.xlu0 %v1082
    %v1109 = vpop.xlane.xlu0 %1108
    %1110 = vmax.xlane.f32.xlu0 %v1083
    %v1111 = vpop.xlane.xlu0 %1110
    %1112 = vmax.xlane.f32.xlu0 %v1084
    %v1113 = vpop.xlane.xlu0 %1112
    %1114 = vmax.xlane.f32.xlu0 %v1085
    %v1115 = vpop.xlane.xlu0 %1114
    %1116 = vmax.xlane.f32.xlu0 %v1086
    %v1117 = vpop.xlane.xlu0 %1116
    %1118 = vmax.xlane.f32.xlu0 %v1087
    %v1119 = vpop.xlane.xlu0 %1118
    %v1120 = vsub.f32 %v1072, %v1089
    %v1121 = vsub.f32 %v1073, %v1091
    %v1122 = vsub.f32 %v1074, %v1093
    %v1123 = vsub.f32 %v1075, %v1095
    %v1124 = vsub.f32 %v1076, %v1097
    %v1125 = vsub.f32 %v1077, %v1099
    %v1126 = vsub.f32 %v1078, %v1101
    %v1127 = vsub.f32 %v1079, %v1103
    %v1128 = vsub.f32 %v1080, %v1105
    %v1129 = vsub.f32 %v1081, %v1107
    %v1130 = vsub.f32 %v1082, %v1109
    %v1131 = vsub.f32 %v1083, %v1111
    %v1132 = vsub.f32 %v1084, %v1113
    %v1133 = vsub.f32 %v1085, %v1115
    %v1134 = vsub.f32 %v1086, %v1117
    %v1135 = vsub.f32 %v1087, %v1119
    %v1136 = vmul.f32 %v1120, 1.442695
    %v1137 = vpow.pop %v1136
    %v1138 = vmul.f32 %v1121, 1.442695
    %v1139 = vpow.pop %v1138
    %v1140 = vmul.f32 %v1122, 1.442695
    %v1141 = vpow.pop %v1140
    %v1142 = vmul.f32 %v1123, 1.442695
    %v1143 = vpow.pop %v1142
    %v1144 = vmul.f32 %v1124, 1.442695
    %v1145 = vpow.pop %v1144
    %v1146 = vmul.f32 %v1125, 1.442695
    %v1147 = vpow.pop %v1146
    %v1148 = vmul.f32 %v1126, 1.442695
    %v1149 = vpow.pop %v1148
    %v1150 = vmul.f32 %v1127, 1.442695
    %v1151 = vpow.pop %v1150
    %v1152 = vmul.f32 %v1128, 1.442695
    %v1153 = vpow.pop %v1152
    %v1154 = vmul.f32 %v1129, 1.442695
    %v1155 = vpow.pop %v1154
    %v1156 = vmul.f32 %v1130, 1.442695
    %v1157 = vpow.pop %v1156
    %v1158 = vmul.f32 %v1131, 1.442695
    %v1159 = vpow.pop %v1158
    %v1160 = vmul.f32 %v1132, 1.442695
    %v1161 = vpow.pop %v1160
    %v1162 = vmul.f32 %v1133, 1.442695
    %v1163 = vpow.pop %v1162
    %v1164 = vmul.f32 %v1134, 1.442695
    %v1165 = vpow.pop %v1164
    %v1166 = vmul.f32 %v1135, 1.442695
    %v1167 = vpow.pop %v1166
    %v1168 = vpack.c.bf16 %v1139, %v1137
    %v1169 = vpack.c.bf16 %v1143, %v1141
    %v1170 = vpack.c.bf16 %v1147, %v1145
    %v1171 = vpack.c.bf16 %v1151, %v1149
    %v1172 = vpack.c.bf16 %v1155, %v1153
    %v1173 = vpack.c.bf16 %v1159, %v1157
    %v1174 = vpack.c.bf16 %v1163, %v1161
    %v1175 = vpack.c.bf16 %v1167, %v1165
    %1176 = vmatprep.subr.bf16.mxu0 0
    %1177 = vmatpush1.bf16.xpose.msra.mxu0 %v1168
    %1178 = vmatprep.subr.bf16.mxu0 0
    %1179 = vmatpush1.bf16.xpose.msra.mxu0 %v1169
    %1180 = vmatprep.subr.bf16.mxu0 0
    %1181 = vmatpush1.bf16.xpose.msra.mxu0 %v1170
    %1182 = vmatprep.subr.bf16.mxu0 0
    %1183 = vmatpush1.bf16.xpose.msra.mxu0 %v1171
    %1184 = vmatprep.subr.bf16.mxu0 0
    %1185 = vmatpush1.bf16.xpose.msra.mxu0 %v1172
    %1186 = vmatprep.subr.bf16.mxu0 0
    %1187 = vmatpush1.bf16.xpose.msra.mxu0 %v1173
    %1188 = vmatprep.subr.bf16.mxu0 0
    %1189 = vmatpush1.bf16.xpose.msra.mxu0 %v1174
    %1190 = vmatprep.subr.bf16.mxu0 0
    %1191 = vmatpush1.bf16.xpose.msra.mxu0 %v1175
    %1192 = vmatprep.subr.bf16.mxu0 0
    %1193 = vmatpush1.bf16.xpose.msra.mxu0 0
    %1194 = vmatprep.subr.bf16.mxu0 0
    %1195 = vmatpush1.bf16.xpose.msra.mxu0 0
    %1196 = vmatprep.subr.bf16.mxu0 0
    %1197 = vmatpush1.bf16.xpose.msra.mxu0 0
    %1198 = vmatprep.subr.bf16.mxu0 0
    %1199 = vmatpush1.bf16.xpose.msra.mxu0 0
    %1200 = vmatprep.subr.bf16.mxu0 0
    %1201 = vmatpush1.bf16.xpose.msra.mxu0 0
    %1202 = vmatprep.subr.bf16.mxu0 0
    %1203 = vmatpush1.bf16.xpose.msra.mxu0 0
    %1204 = vmatprep.subr.bf16.mxu0 0
    %1205 = vmatpush1.bf16.xpose.msra.mxu0 0
    %1206 = vmatprep.subr.bf16.mxu0 0
    %1207 = vmatpush1.bf16.xpose.msra.mxu0 0
    %1208 = vmatprep.mubr.bf16.mxu0 0
    %1209 = vmatmul.mubr.bf16.gmra.mrb[0].mxu0 %v173
    %v1210 = vpop.f32.mrb[0].mxu0
    %v1211 = vadd.f32 0.0, %v1210
    %v1212 = vpop.f32.mrb[0].mxu0
    %v1213 = vpop.f32.mrb[0].mxu0
    %v1214 = vadd.f32 0.0, %v1213
    %v1215 = vpop.f32.mrb[0].mxu0
    %1216 = vdwg.mxu0
    %1217 = vmatprep.subr.bf16.mxu0 0
    %1218 = vmatpush1.bf16.xpose.msra.mxu0 %v1168
    %1219 = vmatprep.subr.bf16.mxu0 0
    %1220 = vmatpush1.bf16.xpose.msra.mxu0 %v1169
    %1221 = vmatprep.subr.bf16.mxu0 0
    %1222 = vmatpush1.bf16.xpose.msra.mxu0 %v1170
    %1223 = vmatprep.subr.bf16.mxu0 0
    %1224 = vmatpush1.bf16.xpose.msra.mxu0 %v1171
    %1225 = vmatprep.subr.bf16.mxu0 0
    %1226 = vmatpush1.bf16.xpose.msra.mxu0 %v1172
    %1227 = vmatprep.subr.bf16.mxu0 0
    %1228 = vmatpush1.bf16.xpose.msra.mxu0 %v1173
    %1229 = vmatprep.subr.bf16.mxu0 0
    %1230 = vmatpush1.bf16.xpose.msra.mxu0 %v1174
    %1231 = vmatprep.subr.bf16.mxu0 0
    %1232 = vmatpush1.bf16.xpose.msra.mxu0 %v1175
    %1233 = vmatprep.subr.bf16.mxu0 0
    %1234 = vmatpush1.bf16.xpose.msra.mxu0 0
    %1235 = vmatprep.subr.bf16.mxu0 0
    %1236 = vmatpush1.bf16.xpose.msra.mxu0 0
    %1237 = vmatprep.subr.bf16.mxu0 0
    %1238 = vmatpush1.bf16.xpose.msra.mxu0 0
    %1239 = vmatprep.subr.bf16.mxu0 0
    %1240 = vmatpush1.bf16.xpose.msra.mxu0 0
    %1241 = vmatprep.subr.bf16.mxu0 0
    %1242 = vmatpush1.bf16.xpose.msra.mxu0 0
    %1243 = vmatprep.subr.bf16.mxu0 0
    %1244 = vmatpush1.bf16.xpose.msra.mxu0 0
    %1245 = vmatprep.subr.bf16.mxu0 0
    %1246 = vmatpush1.bf16.xpose.msra.mxu0 0
    %1247 = vmatprep.subr.bf16.mxu0 0
    %1248 = vmatpush1.bf16.xpose.msra.mxu0 0
    %1249 = vmatprep.mubr.bf16.mxu0 0
    %1250 = vmatmul.mubr.bf16.gmra.mrb[0].mxu0 1065369472
    %v1251 = vpop.f32.mrb[0].mxu0
    %v1252 = vadd.f32 0.0, %v1251
    %v1253 = vpop.f32.mrb[0].mxu0
    %v1254 = vpop.f32.mrb[0].mxu0
    %v1255 = vpop.f32.mrb[0].mxu0
    %1256 = vdwg.mxu0
    %v1257 = vrcp.pop %v1252
    %v1258 = vlaneseq
    %v1259 = vshrl.u32 %v1258, 7
    %v1260 = vsub.s32 0, %v1259
    %v1261 = vrot.slane %v1257, %v1260
    %v1262 = vmul.f32 %v1211, %v1261
    %v1263 = vmul.f32 %v1214, %v1261
    %v1264 = vadd.f32 %v1262, 0.0
    %v1265 = vadd.f32 %v1263, 0.0
    %1266 = vxpose.xlu0.c.b16.start [1/8] %v169, 128
    %1267 = vxpose.xlu0.c.b16.cont [2/8] 0, 128
    %1268 = vxpose.xlu0.c.b16.cont [3/8] 0, 128
    %1269 = vxpose.xlu0.c.b16.cont [4/8] 0, 128
    %1270 = vxpose.xlu0.c.b16.cont [5/8] 0, 128
    %1271 = vxpose.xlu0.c.b16.cont [6/8] 0, 128
    %1272 = vxpose.xlu0.c.b16.cont [7/8] 0, 128
    %1273 = vxpose.xlu0.c.b16.end [8/8] 0, 128
    %v1274 = vpop.trf.xlu0
    %v1275 = vpop.trf.xlu0
    %v1276 = vpop.trf.xlu0
    %v1277 = vpop.trf.xlu0
    %v1278 = vpop.trf.xlu0
    %v1279 = vpop.trf.xlu0
    %v1280 = vpop.trf.xlu0
    %v1281 = vpop.trf.xlu0
    %v1283 = vsel %vm197, %v1274, 0
    %v1286 = vsel %vm197, %v1275, 0
    %v1289 = vsel %vm197, %v1276, 0
    %v1292 = vsel %vm197, %v1277, 0
    %v1295 = vsel %vm197, %v1278, 0
    %v1298 = vsel %vm197, %v1279, 0
    %v1301 = vsel %vm197, %v1280, 0
    %v1304 = vsel %vm197, %v1281, 0
    %1306 = vmatprep.subr.bf16.mxu0 0
    %1307 = vmatpush1.bf16.msra.mxu0 %v171
    %1308 = vmatprep.subr.bf16.mxu0 0
    %1309 = vmatpush1.bf16.msra.mxu0 0
    %1310 = vmatprep.subr.bf16.mxu0 0
    %1311 = vmatpush1.bf16.msra.mxu0 0
    %1312 = vmatprep.subr.bf16.mxu0 0
    %1313 = vmatpush1.bf16.msra.mxu0 0
    %1314 = vmatprep.subr.bf16.mxu0 0
    %1315 = vmatpush1.bf16.msra.mxu0 0
    %1316 = vmatprep.subr.bf16.mxu0 0
    %1317 = vmatpush1.bf16.msra.mxu0 0
    %1318 = vmatprep.subr.bf16.mxu0 0
    %1319 = vmatpush1.bf16.msra.mxu0 0
    %1320 = vmatprep.subr.bf16.mxu0 0
    %1321 = vmatpush1.bf16.msra.mxu0 0
    %1322 = vmatprep.subr.bf16.mxu0 0
    %1323 = vmatpush1.bf16.msra.mxu0 0
    %1324 = vmatprep.subr.bf16.mxu0 0
    %1325 = vmatpush1.bf16.msra.mxu0 0
    %1326 = vmatprep.subr.bf16.mxu0 0
    %1327 = vmatpush1.bf16.msra.mxu0 0
    %1328 = vmatprep.subr.bf16.mxu0 0
    %1329 = vmatpush1.bf16.msra.mxu0 0
    %1330 = vmatprep.subr.bf16.mxu0 0
    %1331 = vmatpush1.bf16.msra.mxu0 0
    %1332 = vmatprep.subr.bf16.mxu0 0
    %1333 = vmatpush1.bf16.msra.mxu0 0
    %1334 = vmatprep.subr.bf16.mxu0 0
    %1335 = vmatpush1.bf16.msra.mxu0 0
    %1336 = vmatprep.subr.bf16.mxu0 0
    %1337 = vmatpush1.bf16.msra.mxu0 0
    %1338 = vmatprep.mubr.bf16.mxu0 0
    %1339 = vmatmul.mubr.bf16.gmra.mrb[0].mxu0 %v1283
    %v1340 = vpop.f32.mrb[0].mxu0
    %v1341 = vadd.f32 0.0, %v1340
    %v1342 = vpop.f32.mrb[0].mxu0
    %v1343 = vpop.f32.mrb[0].mxu0
    %v1344 = vadd.f32 0.0, %v1343
    %v1345 = vpop.f32.mrb[0].mxu0
    %1346 = vmatprep.mubr.bf16.mxu0 0
    %1347 = vmatmul.mubr.bf16.gmra.mrb[0].mxu0 %v1286
    %v1348 = vpop.f32.mrb[0].mxu0
    %v1349 = vadd.f32 0.0, %v1348
    %v1350 = vpop.f32.mrb[0].mxu0
    %v1351 = vpop.f32.mrb[0].mxu0
    %v1352 = vadd.f32 0.0, %v1351
    %v1353 = vpop.f32.mrb[0].mxu0
    %1354 = vmatprep.mubr.bf16.mxu0 0
    %1355 = vmatmul.mubr.bf16.gmra.mrb[0].mxu0 %v1289
    %v1356 = vpop.f32.mrb[0].mxu0
    %v1357 = vadd.f32 0.0, %v1356
    %v1358 = vpop.f32.mrb[0].mxu0
    %v1359 = vpop.f32.mrb[0].mxu0
    %v1360 = vadd.f32 0.0, %v1359
    %v1361 = vpop.f32.mrb[0].mxu0
    %1362 = vmatprep.mubr.bf16.mxu0 0
    %1363 = vmatmul.mubr.bf16.gmra.mrb[0].mxu0 %v1292
    %v1364 = vpop.f32.mrb[0].mxu0
    %v1365 = vadd.f32 0.0, %v1364
    %v1366 = vpop.f32.mrb[0].mxu0
    %v1367 = vpop.f32.mrb[0].mxu0
    %v1368 = vadd.f32 0.0, %v1367
    %v1369 = vpop.f32.mrb[0].mxu0
    %1370 = vmatprep.mubr.bf16.mxu0 0
    %1371 = vmatmul.mubr.bf16.gmra.mrb[0].mxu0 %v1295
    %v1372 = vpop.f32.mrb[0].mxu0
    %v1373 = vadd.f32 0.0, %v1372
    %v1374 = vpop.f32.mrb[0].mxu0
    %v1375 = vpop.f32.mrb[0].mxu0
    %v1376 = vadd.f32 0.0, %v1375
    %v1377 = vpop.f32.mrb[0].mxu0
    %1378 = vmatprep.mubr.bf16.mxu0 0
    %1379 = vmatmul.mubr.bf16.gmra.mrb[0].mxu0 %v1298
    %v1380 = vpop.f32.mrb[0].mxu0
    %v1381 = vadd.f32 0.0, %v1380
    %v1382 = vpop.f32.mrb[0].mxu0
    %v1383 = vpop.f32.mrb[0].mxu0
    %v1384 = vadd.f32 0.0, %v1383
    %v1385 = vpop.f32.mrb[0].mxu0
    %1386 = vmatprep.mubr.bf16.mxu0 0
    %1387 = vmatmul.mubr.bf16.gmra.mrb[0].mxu0 %v1301
    %v1388 = vpop.f32.mrb[0].mxu0
    %v1389 = vadd.f32 0.0, %v1388
    %v1390 = vpop.f32.mrb[0].mxu0
    %v1391 = vpop.f32.mrb[0].mxu0
    %v1392 = vadd.f32 0.0, %v1391
    %v1393 = vpop.f32.mrb[0].mxu0
    %1394 = vmatprep.mubr.bf16.mxu0 0
    %1395 = vmatmul.mubr.bf16.gmra.mrb[0].mxu0 %v1304
    %v1396 = vpop.f32.mrb[0].mxu0
    %v1397 = vadd.f32 0.0, %v1396
    %v1398 = vpop.f32.mrb[0].mxu0
    %v1399 = vpop.f32.mrb[0].mxu0
    %v1400 = vadd.f32 0.0, %v1399
    %v1401 = vpop.f32.mrb[0].mxu0
    %1402 = vdwg.mxu0
    %v1403 = vsub.f32 %v1341, %v1070
    %v1404 = vsub.f32 %v1344, %v1070
    %v1405 = vsub.f32 %v1349, %v1070
    %v1406 = vsub.f32 %v1352, %v1070
    %v1407 = vsub.f32 %v1357, %v1070
    %v1408 = vsub.f32 %v1360, %v1070
    %v1409 = vsub.f32 %v1365, %v1070
    %v1410 = vsub.f32 %v1368, %v1070
    %v1411 = vsub.f32 %v1373, %v1070
    %v1412 = vsub.f32 %v1376, %v1070
    %v1413 = vsub.f32 %v1381, %v1070
    %v1414 = vsub.f32 %v1384, %v1070
    %v1415 = vsub.f32 %v1389, %v1070
    %v1416 = vsub.f32 %v1392, %v1070
    %v1417 = vsub.f32 %v1397, %v1070
    %v1418 = vsub.f32 %v1400, %v1070
    %1419 = vmax.xlane.f32.xlu0 %v1403
    %v1420 = vpop.xlane.xlu0 %1419
    %1421 = vmax.xlane.f32.xlu0 %v1404
    %v1422 = vpop.xlane.xlu0 %1421
    %1423 = vmax.xlane.f32.xlu0 %v1405
    %v1424 = vpop.xlane.xlu0 %1423
    %1425 = vmax.xlane.f32.xlu0 %v1406
    %v1426 = vpop.xlane.xlu0 %1425
    %1427 = vmax.xlane.f32.xlu0 %v1407
    %v1428 = vpop.xlane.xlu0 %1427
    %1429 = vmax.xlane.f32.xlu0 %v1408
    %v1430 = vpop.xlane.xlu0 %1429
    %1431 = vmax.xlane.f32.xlu0 %v1409
    %v1432 = vpop.xlane.xlu0 %1431
    %1433 = vmax.xlane.f32.xlu0 %v1410
    %v1434 = vpop.xlane.xlu0 %1433
    %1435 = vmax.xlane.f32.xlu0 %v1411
    %v1436 = vpop.xlane.xlu0 %1435
    %1437 = vmax.xlane.f32.xlu0 %v1412
    %v1438 = vpop.xlane.xlu0 %1437
    %1439 = vmax.xlane.f32.xlu0 %v1413
    %v1440 = vpop.xlane.xlu0 %1439
    %1441 = vmax.xlane.f32.xlu0 %v1414
    %v1442 = vpop.xlane.xlu0 %1441
    %1443 = vmax.xlane.f32.xlu0 %v1415
    %v1444 = vpop.xlane.xlu0 %1443
    %1445 = vmax.xlane.f32.xlu0 %v1416
    %v1446 = vpop.xlane.xlu0 %1445
    %1447 = vmax.xlane.f32.xlu0 %v1417
    %v1448 = vpop.xlane.xlu0 %1447
    %1449 = vmax.xlane.f32.xlu0 %v1418
    %v1450 = vpop.xlane.xlu0 %1449
    %v1451 = vsub.f32 %v1403, %v1420
    %v1452 = vsub.f32 %v1404, %v1422
    %v1453 = vsub.f32 %v1405, %v1424
    %v1454 = vsub.f32 %v1406, %v1426
    %v1455 = vsub.f32 %v1407, %v1428
    %v1456 = vsub.f32 %v1408, %v1430
    %v1457 = vsub.f32 %v1409, %v1432
    %v1458 = vsub.f32 %v1410, %v1434
    %v1459 = vsub.f32 %v1411, %v1436
    %v1460 = vsub.f32 %v1412, %v1438
    %v1461 = vsub.f32 %v1413, %v1440
    %v1462 = vsub.f32 %v1414, %v1442
    %v1463 = vsub.f32 %v1415, %v1444
    %v1464 = vsub.f32 %v1416, %v1446
    %v1465 = vsub.f32 %v1417, %v1448
    %v1466 = vsub.f32 %v1418, %v1450
    %v1467 = vmul.f32 %v1451, 1.442695
    %v1468 = vpow.pop %v1467
    %v1469 = vmul.f32 %v1452, 1.442695
    %v1470 = vpow.pop %v1469
    %v1471 = vmul.f32 %v1453, 1.442695
    %v1472 = vpow.pop %v1471
    %v1473 = vmul.f32 %v1454, 1.442695
    %v1474 = vpow.pop %v1473
    %v1475 = vmul.f32 %v1455, 1.442695
    %v1476 = vpow.pop %v1475
    %v1477 = vmul.f32 %v1456, 1.442695
    %v1478 = vpow.pop %v1477
    %v1479 = vmul.f32 %v1457, 1.442695
    %v1480 = vpow.pop %v1479
    %v1481 = vmul.f32 %v1458, 1.442695
    %v1482 = vpow.pop %v1481
    %v1483 = vmul.f32 %v1459, 1.442695
    %v1484 = vpow.pop %v1483
    %v1485 = vmul.f32 %v1460, 1.442695
    %v1486 = vpow.pop %v1485
    %v1487 = vmul.f32 %v1461, 1.442695
    %v1488 = vpow.pop %v1487
    %v1489 = vmul.f32 %v1462, 1.442695
    %v1490 = vpow.pop %v1489
    %v1491 = vmul.f32 %v1463, 1.442695
    %v1492 = vpow.pop %v1491
    %v1493 = vmul.f32 %v1464, 1.442695
    %v1494 = vpow.pop %v1493
    %v1495 = vmul.f32 %v1465, 1.442695
    %v1496 = vpow.pop %v1495
    %v1497 = vmul.f32 %v1466, 1.442695
    %v1498 = vpow.pop %v1497
    %v1499 = vpack.c.bf16 %v1470, %v1468
    %v1500 = vpack.c.bf16 %v1474, %v1472
    %v1501 = vpack.c.bf16 %v1478, %v1476
    %v1502 = vpack.c.bf16 %v1482, %v1480
    %v1503 = vpack.c.bf16 %v1486, %v1484
    %v1504 = vpack.c.bf16 %v1490, %v1488
    %v1505 = vpack.c.bf16 %v1494, %v1492
    %v1506 = vpack.c.bf16 %v1498, %v1496
    %1507 = vmatprep.subr.bf16.mxu0 0
    %1508 = vmatpush1.bf16.xpose.msra.mxu0 %v1499
    %1509 = vmatprep.subr.bf16.mxu0 0
    %1510 = vmatpush1.bf16.xpose.msra.mxu0 %v1500
    %1511 = vmatprep.subr.bf16.mxu0 0
    %1512 = vmatpush1.bf16.xpose.msra.mxu0 %v1501
    %1513 = vmatprep.subr.bf16.mxu0 0
    %1514 = vmatpush1.bf16.xpose.msra.mxu0 %v1502
    %1515 = vmatprep.subr.bf16.mxu0 0
    %1516 = vmatpush1.bf16.xpose.msra.mxu0 %v1503
    %1517 = vmatprep.subr.bf16.mxu0 0
    %1518 = vmatpush1.bf16.xpose.msra.mxu0 %v1504
    %1519 = vmatprep.subr.bf16.mxu0 0
    %1520 = vmatpush1.bf16.xpose.msra.mxu0 %v1505
    %1521 = vmatprep.subr.bf16.mxu0 0
    %1522 = vmatpush1.bf16.xpose.msra.mxu0 %v1506
    %1523 = vmatprep.subr.bf16.mxu0 0
    %1524 = vmatpush1.bf16.xpose.msra.mxu0 0
    %1525 = vmatprep.subr.bf16.mxu0 0
    %1526 = vmatpush1.bf16.xpose.msra.mxu0 0
    %1527 = vmatprep.subr.bf16.mxu0 0
    %1528 = vmatpush1.bf16.xpose.msra.mxu0 0
    %1529 = vmatprep.subr.bf16.mxu0 0
    %1530 = vmatpush1.bf16.xpose.msra.mxu0 0
    %1531 = vmatprep.subr.bf16.mxu0 0
    %1532 = vmatpush1.bf16.xpose.msra.mxu0 0
    %1533 = vmatprep.subr.bf16.mxu0 0
    %1534 = vmatpush1.bf16.xpose.msra.mxu0 0
    %1535 = vmatprep.subr.bf16.mxu0 0
    %1536 = vmatpush1.bf16.xpose.msra.mxu0 0
    %1537 = vmatprep.subr.bf16.mxu0 0
    %1538 = vmatpush1.bf16.xpose.msra.mxu0 0
    %1539 = vmatprep.mubr.bf16.mxu0 0
    %1540 = vmatmul.mubr.bf16.gmra.mrb[0].mxu0 %v175
    %v1541 = vpop.f32.mrb[0].mxu0
    %v1542 = vadd.f32 0.0, %v1541
    %v1543 = vpop.f32.mrb[0].mxu0
    %v1544 = vpop.f32.mrb[0].mxu0
    %v1545 = vadd.f32 0.0, %v1544
    %v1546 = vpop.f32.mrb[0].mxu0
    %1547 = vdwg.mxu0
    %1548 = vmatprep.subr.bf16.mxu0 0
    %1549 = vmatpush1.bf16.xpose.msra.mxu0 %v1499
    %1550 = vmatprep.subr.bf16.mxu0 0
    %1551 = vmatpush1.bf16.xpose.msra.mxu0 %v1500
    %1552 = vmatprep.subr.bf16.mxu0 0
    %1553 = vmatpush1.bf16.xpose.msra.mxu0 %v1501
    %1554 = vmatprep.subr.bf16.mxu0 0
    %1555 = vmatpush1.bf16.xpose.msra.mxu0 %v1502
    %1556 = vmatprep.subr.bf16.mxu0 0
    %1557 = vmatpush1.bf16.xpose.msra.mxu0 %v1503
    %1558 = vmatprep.subr.bf16.mxu0 0
    %1559 = vmatpush1.bf16.xpose.msra.mxu0 %v1504
    %1560 = vmatprep.subr.bf16.mxu0 0
    %1561 = vmatpush1.bf16.xpose.msra.mxu0 %v1505
    %1562 = vmatprep.subr.bf16.mxu0 0
    %1563 = vmatpush1.bf16.xpose.msra.mxu0 %v1506
    %1564 = vmatprep.subr.bf16.mxu0 0
    %1565 = vmatpush1.bf16.xpose.msra.mxu0 0
    %1566 = vmatprep.subr.bf16.mxu0 0
    %1567 = vmatpush1.bf16.xpose.msra.mxu0 0
    %1568 = vmatprep.subr.bf16.mxu0 0
    %1569 = vmatpush1.bf16.xpose.msra.mxu0 0
    %1570 = vmatprep.subr.bf16.mxu0 0
    %1571 = vmatpush1.bf16.xpose.msra.mxu0 0
    %1572 = vmatprep.subr.bf16.mxu0 0
    %1573 = vmatpush1.bf16.xpose.msra.mxu0 0
    %1574 = vmatprep.subr.bf16.mxu0 0
    %1575 = vmatpush1.bf16.xpose.msra.mxu0 0
    %1576 = vmatprep.subr.bf16.mxu0 0
    %1577 = vmatpush1.bf16.xpose.msra.mxu0 0
    %1578 = vmatprep.subr.bf16.mxu0 0
    %1579 = vmatpush1.bf16.xpose.msra.mxu0 0
    %1580 = vmatprep.mubr.bf16.mxu0 0
    %1581 = vmatmul.mubr.bf16.gmra.mrb[0].mxu0 1065369472
    %v1582 = vpop.f32.mrb[0].mxu0
    %v1583 = vadd.f32 0.0, %v1582
    %v1584 = vpop.f32.mrb[0].mxu0
    %v1585 = vpop.f32.mrb[0].mxu0
    %v1586 = vpop.f32.mrb[0].mxu0
    %1587 = vdwg.mxu0
    %v1588 = vrcp.pop %v1583
    %v1589 = vlaneseq
    %v1590 = vshrl.u32 %v1589, 7
    %v1591 = vsub.s32 0, %v1590
    %v1592 = vrot.slane %v1588, %v1591
    %v1593 = vmul.f32 %v1542, %v1592
    %v1594 = vmul.f32 %v1545, %v1592
    %v1595 = vadd.f32 %v1264, %v1593
    %v1596 = vadd.f32 %v1265, %v1594
    %v1597 = vpack.c.bf16 %v1596, %v1595
    %1598 = vmatprep.subr.bf16.mxu0 0
    %1599 = vmatpush1.bf16.msra.mxu0 %v1597
    %1600 = vmatprep.subr.bf16.mxu0 0
    %1601 = vmatpush1.bf16.msra.mxu0 0
    %1602 = vmatprep.subr.bf16.mxu0 0
    %1603 = vmatpush1.bf16.msra.mxu0 0
    %1604 = vmatprep.subr.bf16.mxu0 0
    %1605 = vmatpush1.bf16.msra.mxu0 0
    %1606 = vmatprep.subr.bf16.mxu0 0
    %1607 = vmatpush1.bf16.msra.mxu0 0
    %1608 = vmatprep.subr.bf16.mxu0 0
    %1609 = vmatpush1.bf16.msra.mxu0 0
    %1610 = vmatprep.subr.bf16.mxu0 0
    %1611 = vmatpush1.bf16.msra.mxu0 0
    %1612 = vmatprep.subr.bf16.mxu0 0
    %1613 = vmatpush1.bf16.msra.mxu0 0
    %1614 = vmatprep.subr.bf16.mxu0 0
    %1615 = vmatpush1.bf16.msra.mxu0 0
    %1616 = vmatprep.subr.bf16.mxu0 0
    %1617 = vmatpush1.bf16.msra.mxu0 0
    %1618 = vmatprep.subr.bf16.mxu0 0
    %1619 = vmatpush1.bf16.msra.mxu0 0
    %1620 = vmatprep.subr.bf16.mxu0 0
    %1621 = vmatpush1.bf16.msra.mxu0 0
    %1622 = vmatprep.subr.bf16.mxu0 0
    %1623 = vmatpush1.bf16.msra.mxu0 0
    %1624 = vmatprep.subr.bf16.mxu0 0
    %1625 = vmatpush1.bf16.msra.mxu0 0
    %1626 = vmatprep.subr.bf16.mxu0 0
    %1627 = vmatpush1.bf16.msra.mxu0 0
    %1628 = vmatprep.subr.bf16.mxu0 0
    %1629 = vmatpush1.bf16.msra.mxu0 0
    %1630 = vmatprep.mubr.bf16.mxu0 0
    %1631 = vmatmul.mubr.bf16.gmra.mrb[0].mxu0 %v862
    %v1632 = vpop.f32.mrb[0].mxu0
    %v1633 = vadd.f32 0.0, %v1632
    %v1634 = vpop.f32.mrb[0].mxu0
    %v1635 = vpop.f32.mrb[0].mxu0
    %v1636 = vadd.f32 0.0, %v1635
    %v1637 = vpop.f32.mrb[0].mxu0
    %1638 = vmatprep.mubr.bf16.mxu0 0
    %1639 = vmatmul.mubr.bf16.gmra.mrb[0].mxu0 %v865
    %v1640 = vpop.f32.mrb[0].mxu0
    %v1641 = vadd.f32 0.0, %v1640
    %v1642 = vpop.f32.mrb[0].mxu0
    %v1643 = vpop.f32.mrb[0].mxu0
    %v1644 = vadd.f32 0.0, %v1643
    %v1645 = vpop.f32.mrb[0].mxu0
    %1646 = vdwg.mxu0
    %v1647 = vld [vmem:[%s0 + $0x8] sm:$0xff]
    %v1648 = vld [vmem:[%s0 + $0x18] sm:$0xff]
    %v1649 = vld [vmem:[%s0 + $0x28] sm:$0xff]
    %v1650 = vld [vmem:[%s0 + $0x38] sm:$0xff]
    %v1651 = vadd.f32 %v1647, %v1633
    %v1652 = vadd.f32 %v1648, %v1636
    %v1653 = vadd.f32 %v1649, %v1641
    %v1654 = vadd.f32 %v1650, %v1644
    %s1655 = scalar_lea.vmem [#allocation2], 32
    %1656 = vst [vmem:[%s1655] sm:$0xff] %v1651
    %1657 = vst [vmem:[%s1655 + $0x8] sm:$0xff] %v1652
    %1658 = vst [vmem:[%s1655 + $0x10] sm:$0xff] %v1653
    %1659 = vst [vmem:[%s1655 + $0x18] sm:$0xff] %v1654
    // Predicated region
    $region18: #{talking_heads_forward.1} parent=1 // pred_check
      _
    $region19: #{talking_heads_forward.1} parent=1 // pred_check_branch
      %1661 = sbr.rel (0) target = $region21
    $region20: #{talking_heads_forward.1} parent=1 // pred_region
      %s1663 = ssub.s32 1024, 1024
      %1664 = vsyncadd [#allocation3], %s1663
      %s1665 = sshll.u32 [#allocation2], 4
      %s1666 = int_to_ptr.vmem [resolvable:$true] %s1665
      %1671 = dma.vmem_to_hbm [thread:$0]  %s1666, 1024, %s4, [#allocation3], 128, 128, 8
    $region21: #{talking_heads_forward.1} parent=1 // pred_fallthru
      _
    // Predicated region
    $region22: #{talking_heads_forward.1} parent=1 // pred_check
      _
    $region23: #{talking_heads_forward.1} parent=1 // pred_check_branch
      %1673 = sbr.rel (0) target = $region25
    $region24: #{talking_heads_forward.1} parent=1 // pred_region
      %1674 = dma.done [#allocation3], 1024
    $region25: #{talking_heads_forward.1} parent=1 // pred_fallthru
      _
    %1675 = vsyncpa [#allocation3], 1

</llo_original>
